<compile_context>
chip_gen: v7x
topology: tpu7x:2x2x1
jax: 0.10.0
libtpu: 0.0.40
codegen_flags: <defaults>
</compile_context>

<pallas_src>
import functools

import jax
import jax.numpy as jnp
from jax.experimental import pallas as pl
from jax.experimental.pallas import tpu as pltpu


def basic_block_kernel(x_ref, w1_ref, s1_ref, b1_ref, w2_ref, s2_ref, b2_ref,
                       m_ref, o_ref, *, wp2):
    # x_ref : (1, 1, C, L1)  per-channel flattened (rows, padded-width) spatial
    # w*_ref: (9, C, C)      tap t = ky*3 + kx, layout [t, cout, cin]
    # s*/b* : (C, 1)         folded BN scale / bias (per output channel)
    # m_ref : (1, 1, LA)     0/1 mask producing the conv2-input padding ring
    # o_ref : (1, 1, C, LB)  flattened output rows (stride wp2), lane-dense
    la = m_ref.shape[2]
    lb = o_ref.shape[3]

    x = x_ref[0, 0]          # (C, L1)  spatial-in-lanes, channels-in-sublanes
    mask = m_ref[0]          # (1, LA)

    offs = [ky * wp2 + kx for ky in range(3) for kx in range(3)]

    # ---- conv1 (3x3, stride 1, pad 1): each tap is a constant lane shift ----
    acc1 = None
    for tap, off in enumerate(offs):
        term = jnp.dot(w1_ref[tap], x[:, off:off + la],
                       preferred_element_type=jnp.float32)
        acc1 = term if acc1 is None else acc1 + term

    # ---- bn1 (folded) + ReLU, then zero the conv2-input pad ring -----------
    hidden = jnp.maximum(acc1 * s1_ref[...] + b1_ref[...], 0.0) * mask  # (C, LA)

    # ---- conv2 (3x3, stride 1, pad 1) on the masked intermediate -----------
    acc2 = None
    for tap, off in enumerate(offs):
        term = jnp.dot(w2_ref[tap], hidden[:, off:off + lb],
                       preferred_element_type=jnp.float32)
        acc2 = term if acc2 is None else acc2 + term

    # ---- bn2 + residual + ReLU ----------------------------------------------
    residual = x[:, 2 * wp2 + 2: 2 * wp2 + 2 + lb]
    out = jnp.maximum(acc2 * s2_ref[...] + b2_ref[...] + residual, 0.0)
    o_ref[0, 0] = out.astype(o_ref.dtype)


def basic_block_pallas(x_nchw, w1_oihw, w2_oihw, s1, b1, s2, b2, *, row_tile=8):
    """x: (N, C, H, W) f32. w*: (C, C, 3, 3) OIHW. s*/b*: (C,) folded BN."""
    N, C, H, W = x_nchw.shape
    # stride=1, downsample=None => inplanes == planes (fail loudly otherwise)
    assert w1_oihw.shape == (C, C, 3, 3) and w2_oihw.shape == (C, C, 3, 3), \
        "BasicBlock kernel supports stride=1 / downsample=None (inplanes == planes)"

    th = max(1, min(row_tile, H))
    while H % th:                      # largest row tile <= row_tile dividing H
        th -= 1
    n_t = H // th
    wp2 = W + 4
    l1 = (th + 4) * wp2                # flattened padded input length per tile
    la = l1 - (2 * wp2 + 2)            # conv1 output / intermediate length
    lb = la - (2 * wp2 + 2)            # conv2 output length (= th*wp2 - 4)

    # --- glue: pad by 2, cut overlapping row tiles, channel-major flatten ----
    xpad2 = jnp.pad(x_nchw, ((0, 0), (0, 0), (2, 2), (2, 2)))
    row_idx = jnp.arange(n_t)[:, None] * th + jnp.arange(th + 4)[None, :]
    x_tiles = xpad2[:, :, row_idx, :]                  # (N, C, n_t, th+4, wp2)
    x_tiles = jnp.transpose(x_tiles, (0, 2, 1, 3, 4)).reshape(N, n_t, C, l1)

    # weights as 9 (Cout, Cin) taps, tap index = ky*3 + kx
    w1_t = jnp.transpose(w1_oihw, (2, 3, 0, 1)).reshape(9, C, C)
    w2_t = jnp.transpose(w2_oihw, (2, 3, 0, 1)).reshape(9, C, C)
    s1c, b1c = s1.reshape(C, 1), b1.reshape(C, 1)
    s2c, b2c = s2.reshape(C, 1), b2.reshape(C, 1)

    # 0/1 mask for the conv2-input padding ring (depends only on the row tile)
    q = jnp.arange(la)
    a, b = q // wp2, q % wp2
    grow = jnp.arange(n_t)[:, None] * th - 1 + a[None, :]
    valid = (grow >= 0) & (grow <= H - 1) & (b[None, :] >= 1) & (b[None, :] <= W)
    mask = valid.astype(jnp.float32).reshape(n_t, 1, la)

    grid_spec = pltpu.PrefetchScalarGridSpec(
        num_scalar_prefetch=0,
        grid=(N, n_t),
        in_specs=[
            pl.BlockSpec((1, 1, C, l1), lambda n, t: (n, t, 0, 0)),
            pl.BlockSpec((9, C, C), lambda n, t: (0, 0, 0)),
            pl.BlockSpec((C, 1), lambda n, t: (0, 0)),
            pl.BlockSpec((C, 1), lambda n, t: (0, 0)),
            pl.BlockSpec((9, C, C), lambda n, t: (0, 0, 0)),
            pl.BlockSpec((C, 1), lambda n, t: (0, 0)),
            pl.BlockSpec((C, 1), lambda n, t: (0, 0)),
            pl.BlockSpec((1, 1, la), lambda n, t: (t, 0, 0)),
        ],
        out_specs=pl.BlockSpec((1, 1, C, lb), lambda n, t: (n, t, 0, 0)),
    )

    out_flat = pl.pallas_call(
        functools.partial(basic_block_kernel, wp2=wp2),
        out_shape=jax.ShapeDtypeStruct((N, n_t, C, lb), jnp.float32),
        grid_spec=grid_spec,
        compiler_params=pltpu.CompilerParams(
            dimension_semantics=("parallel", "parallel"),
            vmem_limit_bytes=32 * 1024 * 1024),
    )(x_tiles, w1_t, s1c, b1c, w2_t, s2c, b2c, mask)

    # --- glue: strip the width padding, stitch the row tiles back ------------
    out = jnp.pad(out_flat, ((0, 0), (0, 0), (0, 0), (0, th * wp2 - lb)))
    out = out.reshape(N, n_t, C, th, wp2)[..., :W]          # (N, n_t, C, th, W)
    out = jnp.transpose(out, (0, 2, 1, 3, 4)).reshape(N, C, H, W)
    return out


def ref_forward_nchw(x, w1_oihw, w2_oihw, s1, b1, s2, b2):
    """Pure-JAX reference matching the PyTorch BasicBlock (eval-mode BN)."""
    def conv(a, w):
        return jax.lax.conv_general_dilated(
            a, w, window_strides=(1, 1), padding=((1, 1), (1, 1)),
            dimension_numbers=("NCHW", "OIHW", "NCHW"))
    out = conv(x, w1_oihw)
    out = out * s1[None, :, None, None] + b1[None, :, None, None]
    out = jnp.maximum(out, 0.0)
    out = conv(out, w2_oihw)
    out = out * s2[None, :, None, None] + b2[None, :, None, None]
    out = jnp.maximum(out + x, 0.0)
    return out


if __name__ == "__main__":
    # Small config consistent with BasicBlock(inplanes=4, planes=4, stride=1)
    N, C, H, W = 2, 4, 16, 16
    eps = 1e-5

    key = jax.random.PRNGKey(0)
    kx, kw1, kw2, kg1, kb1, km1, kv1, kg2, kb2, km2, kv2 = jax.random.split(key, 11)

    x_nchw = jax.random.normal(kx, (N, C, H, W), jnp.float32)

    # conv weights in PyTorch OIHW layout, deterministic init
    w1_oihw = jax.random.normal(kw1, (C, C, 3, 3), jnp.float32) * 0.1
    w2_oihw = jax.random.normal(kw2, (C, C, 3, 3), jnp.float32) * 0.1

    # BatchNorm2d(affine=True) parameters + running stats (eval mode)
    gamma1 = 1.0 + 0.1 * jax.random.normal(kg1, (C,), jnp.float32)
    beta1 = 0.1 * jax.random.normal(kb1, (C,), jnp.float32)
    mean1 = 0.1 * jax.random.normal(km1, (C,), jnp.float32)
    var1 = jnp.abs(jax.random.normal(kv1, (C,), jnp.float32)) + 0.5
    gamma2 = 1.0 + 0.1 * jax.random.normal(kg2, (C,), jnp.float32)
    beta2 = 0.1 * jax.random.normal(kb2, (C,), jnp.float32)
    mean2 = 0.1 * jax.random.normal(km2, (C,), jnp.float32)
    var2 = jnp.abs(jax.random.normal(kv2, (C,), jnp.float32)) + 0.5
    # TODO(synk): training-mode BN (batch statistics) is not implemented; BN is
    # folded as eval-mode per-channel scale/bias.

    # fold BN into per-channel scale / bias
    s1 = gamma1 / jnp.sqrt(var1 + eps)
    b1 = beta1 - mean1 * s1
    s2 = gamma2 / jnp.sqrt(var2 + eps)
    b2 = beta2 - mean2 * s2

    # Pallas kernel (NCHW in/out, matching the PyTorch module)
    out = basic_block_pallas(x_nchw, w1_oihw, w2_oihw, s1, b1, s2, b2, row_tile=8)
    jax.block_until_ready(out)

    # correctness check against pure-JAX reference of the PyTorch module
    ref = ref_forward_nchw(x_nchw, w1_oihw, w2_oihw, s1, b1, s2, b2)
    jax.block_until_ready(ref)
    assert jnp.allclose(out, ref, atol=1e-4, rtol=1e-4), "mismatch vs reference"

    print("KERNEL_OK")
</pallas_src>

<mosaic_0001>
module attributes {stable_mosaic.version = 11 : i64} {
  func.func @basic_block_kernel(%arg0: i32, %arg1: i32, %arg2: memref<1x1x4x240xf32, #tpu.memory_space<vmem>>, %arg3: memref<9x4x4xf32, #tpu.memory_space<vmem>>, %arg4: memref<4x1xf32, #tpu.memory_space<vmem>>, %arg5: memref<4x1xf32, #tpu.memory_space<vmem>>, %arg6: memref<9x4x4xf32, #tpu.memory_space<vmem>>, %arg7: memref<4x1xf32, #tpu.memory_space<vmem>>, %arg8: memref<4x1xf32, #tpu.memory_space<vmem>>, %arg9: memref<1x1x198xf32, #tpu.memory_space<vmem>>, %arg10: memref<1x1x4x156xf32, #tpu.memory_space<vmem>>) attributes {dimension_semantics = [#tpu.dimension_semantics<parallel>, #tpu.dimension_semantics<parallel>], iteration_bounds = array<i64: 2, 2>, scalar_prefetch = 0 : i64, scratch_operands = 0 : i64, tpu.core_type = #tpu.core_type<tc>, window_params = [{transform_indices = @transform_0, window_bounds = array<i64: 1, 1, 4, 240>}, {pipeline_mode = #tpu.pipeline_mode<synchronous>, transform_indices = @transform_1, window_bounds = array<i64: 9, 4, 4>}, {pipeline_mode = #tpu.pipeline_mode<synchronous>, transform_indices = @transform_2, window_bounds = array<i64: 4, 1>}, {pipeline_mode = #tpu.pipeline_mode<synchronous>, transform_indices = @transform_3, window_bounds = array<i64: 4, 1>}, {pipeline_mode = #tpu.pipeline_mode<synchronous>, transform_indices = @transform_4, window_bounds = array<i64: 9, 4, 4>}, {pipeline_mode = #tpu.pipeline_mode<synchronous>, transform_indices = @transform_5, window_bounds = array<i64: 4, 1>}, {pipeline_mode = #tpu.pipeline_mode<synchronous>, transform_indices = @transform_6, window_bounds = array<i64: 4, 1>}, {transform_indices = @transform_7, window_bounds = array<i64: 1, 1, 198>}, {transform_indices = @transform_8, window_bounds = array<i64: 1, 1, 4, 156>}]} {
    %c0 = arith.constant 0 : index
    %c0_0 = arith.constant 0 : index
    %c0_1 = arith.constant 0 : index
    %c0_2 = arith.constant 0 : index
    %0 = vector.load %arg2[%c0, %c0_0, %c0_1, %c0_2] : memref<1x1x4x240xf32, #tpu.memory_space<vmem>>, vector<1x1x4x240xf32>
    %1 = vector.shape_cast %0 : vector<1x1x4x240xf32> to vector<4x240xf32>
    %c0_3 = arith.constant 0 : index
    %c0_4 = arith.constant 0 : index
    %c0_5 = arith.constant 0 : index
    %2 = vector.load %arg9[%c0_3, %c0_4, %c0_5] : memref<1x1x198xf32, #tpu.memory_space<vmem>>, vector<1x1x198xf32>
    %3 = vector.shape_cast %2 : vector<1x1x198xf32> to vector<1x198xf32>
    %c0_6 = arith.constant 0 : index
    %c0_7 = arith.constant 0 : index
    %c0_8 = arith.constant 0 : index
    %4 = vector.load %arg3[%c0_6, %c0_7, %c0_8] : memref<9x4x4xf32, #tpu.memory_space<vmem>>, vector<1x4x4xf32>
    %5 = vector.shape_cast %4 : vector<1x4x4xf32> to vector<4x4xf32>
    %6 = vector.extract_strided_slice %1 {offsets = [0, 0], sizes = [4, 198], strides = [1, 1]} : vector<4x240xf32> to vector<4x198xf32>
    %cst = arith.constant dense<0.000000e+00> : vector<4x198xf32>
    %7 = tpu.matmul %5, %6, %cst {dimension_numbers = #tpu.dot_dimension_numbers<[1], [0], [0], [1], [0, 0, 1, 1], [], []>} : vector<4x4xf32>, vector<4x198xf32>, vector<4x198xf32> -> vector<4x198xf32>
    %c1 = arith.constant 1 : index
    %c0_9 = arith.constant 0 : index
    %c0_10 = arith.constant 0 : index
    %8 = vector.load %arg3[%c1, %c0_9, %c0_10] : memref<9x4x4xf32, #tpu.memory_space<vmem>>, vector<1x4x4xf32>
    %9 = vector.shape_cast %8 : vector<1x4x4xf32> to vector<4x4xf32>
    %10 = vector.extract_strided_slice %1 {offsets = [0, 1], sizes = [4, 198], strides = [1, 1]} : vector<4x240xf32> to vector<4x198xf32>
    %cst_11 = arith.constant dense<0.000000e+00> : vector<4x198xf32>
    %11 = tpu.matmul %9, %10, %cst_11 {dimension_numbers = #tpu.dot_dimension_numbers<[1], [0], [0], [1], [0, 0, 1, 1], [], []>} : vector<4x4xf32>, vector<4x198xf32>, vector<4x198xf32> -> vector<4x198xf32>
    %12 = arith.addf %7, %11 : vector<4x198xf32>
    %c2 = arith.constant 2 : index
    %c0_12 = arith.constant 0 : index
    %c0_13 = arith.constant 0 : index
    %13 = vector.load %arg3[%c2, %c0_12, %c0_13] : memref<9x4x4xf32, #tpu.memory_space<vmem>>, vector<1x4x4xf32>
    %14 = vector.shape_cast %13 : vector<1x4x4xf32> to vector<4x4xf32>
    %15 = vector.extract_strided_slice %1 {offsets = [0, 2], sizes = [4, 198], strides = [1, 1]} : vector<4x240xf32> to vector<4x198xf32>
    %cst_14 = arith.constant dense<0.000000e+00> : vector<4x198xf32>
    %16 = tpu.matmul %14, %15, %cst_14 {dimension_numbers = #tpu.dot_dimension_numbers<[1], [0], [0], [1], [0, 0, 1, 1], [], []>} : vector<4x4xf32>, vector<4x198xf32>, vector<4x198xf32> -> vector<4x198xf32>
    %17 = arith.addf %12, %16 : vector<4x198xf32>
    %c3 = arith.constant 3 : index
    %c0_15 = arith.constant 0 : index
    %c0_16 = arith.constant 0 : index
    %18 = vector.load %arg3[%c3, %c0_15, %c0_16] : memref<9x4x4xf32, #tpu.memory_space<vmem>>, vector<1x4x4xf32>
    %19 = vector.shape_cast %18 : vector<1x4x4xf32> to vector<4x4xf32>
    %20 = vector.extract_strided_slice %1 {offsets = [0, 20], sizes = [4, 198], strides = [1, 1]} : vector<4x240xf32> to vector<4x198xf32>
    %cst_17 = arith.constant dense<0.000000e+00> : vector<4x198xf32>
    %21 = tpu.matmul %19, %20, %cst_17 {dimension_numbers = #tpu.dot_dimension_numbers<[1], [0], [0], [1], [0, 0, 1, 1], [], []>} : vector<4x4xf32>, vector<4x198xf32>, vector<4x198xf32> -> vector<4x198xf32>
    %22 = arith.addf %17, %21 : vector<4x198xf32>
    %c4 = arith.constant 4 : index
    %c0_18 = arith.constant 0 : index
    %c0_19 = arith.constant 0 : index
    %23 = vector.load %arg3[%c4, %c0_18, %c0_19] : memref<9x4x4xf32, #tpu.memory_space<vmem>>, vector<1x4x4xf32>
    %24 = vector.shape_cast %23 : vector<1x4x4xf32> to vector<4x4xf32>
    %25 = vector.extract_strided_slice %1 {offsets = [0, 21], sizes = [4, 198], strides = [1, 1]} : vector<4x240xf32> to vector<4x198xf32>
    %cst_20 = arith.constant dense<0.000000e+00> : vector<4x198xf32>
    %26 = tpu.matmul %24, %25, %cst_20 {dimension_numbers = #tpu.dot_dimension_numbers<[1], [0], [0], [1], [0, 0, 1, 1], [], []>} : vector<4x4xf32>, vector<4x198xf32>, vector<4x198xf32> -> vector<4x198xf32>
    %27 = arith.addf %22, %26 : vector<4x198xf32>
    %c5 = arith.constant 5 : index
    %c0_21 = arith.constant 0 : index
    %c0_22 = arith.constant 0 : index
    %28 = vector.load %arg3[%c5, %c0_21, %c0_22] : memref<9x4x4xf32, #tpu.memory_space<vmem>>, vector<1x4x4xf32>
    %29 = vector.shape_cast %28 : vector<1x4x4xf32> to vector<4x4xf32>
    %30 = vector.extract_strided_slice %1 {offsets = [0, 22], sizes = [4, 198], strides = [1, 1]} : vector<4x240xf32> to vector<4x198xf32>
    %cst_23 = arith.constant dense<0.000000e+00> : vector<4x198xf32>
    %31 = tpu.matmul %29, %30, %cst_23 {dimension_numbers = #tpu.dot_dimension_numbers<[1], [0], [0], [1], [0, 0, 1, 1], [], []>} : vector<4x4xf32>, vector<4x198xf32>, vector<4x198xf32> -> vector<4x198xf32>
    %32 = arith.addf %27, %31 : vector<4x198xf32>
    %c6 = arith.constant 6 : index
    %c0_24 = arith.constant 0 : index
    %c0_25 = arith.constant 0 : index
    %33 = vector.load %arg3[%c6, %c0_24, %c0_25] : memref<9x4x4xf32, #tpu.memory_space<vmem>>, vector<1x4x4xf32>
    %34 = vector.shape_cast %33 : vector<1x4x4xf32> to vector<4x4xf32>
    %35 = vector.extract_strided_slice %1 {offsets = [0, 40], sizes = [4, 198], strides = [1, 1]} : vector<4x240xf32> to vector<4x198xf32>
    %cst_26 = arith.constant dense<0.000000e+00> : vector<4x198xf32>
    %36 = tpu.matmul %34, %35, %cst_26 {dimension_numbers = #tpu.dot_dimension_numbers<[1], [0], [0], [1], [0, 0, 1, 1], [], []>} : vector<4x4xf32>, vector<4x198xf32>, vector<4x198xf32> -> vector<4x198xf32>
    %37 = arith.addf %32, %36 : vector<4x198xf32>
    %c7 = arith.constant 7 : index
    %c0_27 = arith.constant 0 : index
    %c0_28 = arith.constant 0 : index
    %38 = vector.load %arg3[%c7, %c0_27, %c0_28] : memref<9x4x4xf32, #tpu.memory_space<vmem>>, vector<1x4x4xf32>
    %39 = vector.shape_cast %38 : vector<1x4x4xf32> to vector<4x4xf32>
    %40 = vector.extract_strided_slice %1 {offsets = [0, 41], sizes = [4, 198], strides = [1, 1]} : vector<4x240xf32> to vector<4x198xf32>
    %cst_29 = arith.constant dense<0.000000e+00> : vector<4x198xf32>
    %41 = tpu.matmul %39, %40, %cst_29 {dimension_numbers = #tpu.dot_dimension_numbers<[1], [0], [0], [1], [0, 0, 1, 1], [], []>} : vector<4x4xf32>, vector<4x198xf32>, vector<4x198xf32> -> vector<4x198xf32>
    %42 = arith.addf %37, %41 : vector<4x198xf32>
    %c8 = arith.constant 8 : index
    %c0_30 = arith.constant 0 : index
    %c0_31 = arith.constant 0 : index
    %43 = vector.load %arg3[%c8, %c0_30, %c0_31] : memref<9x4x4xf32, #tpu.memory_space<vmem>>, vector<1x4x4xf32>
    %44 = vector.shape_cast %43 : vector<1x4x4xf32> to vector<4x4xf32>
    %45 = vector.extract_strided_slice %1 {offsets = [0, 42], sizes = [4, 198], strides = [1, 1]} : vector<4x240xf32> to vector<4x198xf32>
    %cst_32 = arith.constant dense<0.000000e+00> : vector<4x198xf32>
    %46 = tpu.matmul %44, %45, %cst_32 {dimension_numbers = #tpu.dot_dimension_numbers<[1], [0], [0], [1], [0, 0, 1, 1], [], []>} : vector<4x4xf32>, vector<4x198xf32>, vector<4x198xf32> -> vector<4x198xf32>
    %47 = arith.addf %42, %46 : vector<4x198xf32>
    %c0_33 = arith.constant 0 : index
    %c0_34 = arith.constant 0 : index
    %48 = vector.load %arg4[%c0_33, %c0_34] : memref<4x1xf32, #tpu.memory_space<vmem>>, vector<4x1xf32>
    %49 = vector.broadcast %48 : vector<4x1xf32> to vector<4x198xf32>
    %50 = arith.mulf %47, %49 : vector<4x198xf32>
    %c0_35 = arith.constant 0 : index
    %c0_36 = arith.constant 0 : index
    %51 = vector.load %arg5[%c0_35, %c0_36] : memref<4x1xf32, #tpu.memory_space<vmem>>, vector<4x1xf32>
    %52 = vector.broadcast %51 : vector<4x1xf32> to vector<4x198xf32>
    %53 = arith.addf %50, %52 : vector<4x198xf32>
    %cst_37 = arith.constant 0.000000e+00 : f32
    %54 = vector.broadcast %cst_37 : f32 to vector<4x198xf32>
    %55 = arith.maximumf %53, %54 : vector<4x198xf32>
    %56 = vector.broadcast %3 : vector<1x198xf32> to vector<4x198xf32>
    %57 = arith.mulf %55, %56 : vector<4x198xf32>
    %c0_38 = arith.constant 0 : index
    %c0_39 = arith.constant 0 : index
    %c0_40 = arith.constant 0 : index
    %58 = vector.load %arg6[%c0_38, %c0_39, %c0_40] : memref<9x4x4xf32, #tpu.memory_space<vmem>>, vector<1x4x4xf32>
    %59 = vector.shape_cast %58 : vector<1x4x4xf32> to vector<4x4xf32>
    %60 = vector.extract_strided_slice %57 {offsets = [0, 0], sizes = [4, 156], strides = [1, 1]} : vector<4x198xf32> to vector<4x156xf32>
    %cst_41 = arith.constant dense<0.000000e+00> : vector<4x156xf32>
    %61 = tpu.matmul %59, %60, %cst_41 {dimension_numbers = #tpu.dot_dimension_numbers<[1], [0], [0], [1], [0, 0, 1, 1], [], []>} : vector<4x4xf32>, vector<4x156xf32>, vector<4x156xf32> -> vector<4x156xf32>
    %c1_42 = arith.constant 1 : index
    %c0_43 = arith.constant 0 : index
    %c0_44 = arith.constant 0 : index
    %62 = vector.load %arg6[%c1_42, %c0_43, %c0_44] : memref<9x4x4xf32, #tpu.memory_space<vmem>>, vector<1x4x4xf32>
    %63 = vector.shape_cast %62 : vector<1x4x4xf32> to vector<4x4xf32>
    %64 = vector.extract_strided_slice %57 {offsets = [0, 1], sizes = [4, 156], strides = [1, 1]} : vector<4x198xf32> to vector<4x156xf32>
    %cst_45 = arith.constant dense<0.000000e+00> : vector<4x156xf32>
    %65 = tpu.matmul %63, %64, %cst_45 {dimension_numbers = #tpu.dot_dimension_numbers<[1], [0], [0], [1], [0, 0, 1, 1], [], []>} : vector<4x4xf32>, vector<4x156xf32>, vector<4x156xf32> -> vector<4x156xf32>
    %66 = arith.addf %61, %65 : vector<4x156xf32>
    %c2_46 = arith.constant 2 : index
    %c0_47 = arith.constant 0 : index
    %c0_48 = arith.constant 0 : index
    %67 = vector.load %arg6[%c2_46, %c0_47, %c0_48] : memref<9x4x4xf32, #tpu.memory_space<vmem>>, vector<1x4x4xf32>
    %68 = vector.shape_cast %67 : vector<1x4x4xf32> to vector<4x4xf32>
    %69 = vector.extract_strided_slice %57 {offsets = [0, 2], sizes = [4, 156], strides = [1, 1]} : vector<4x198xf32> to vector<4x156xf32>
    %cst_49 = arith.constant dense<0.000000e+00> : vector<4x156xf32>
    %70 = tpu.matmul %68, %69, %cst_49 {dimension_numbers = #tpu.dot_dimension_numbers<[1], [0], [0], [1], [0, 0, 1, 1], [], []>} : vector<4x4xf32>, vector<4x156xf32>, vector<4x156xf32> -> vector<4x156xf32>
    %71 = arith.addf %66, %70 : vector<4x156xf32>
    %c3_50 = arith.constant 3 : index
    %c0_51 = arith.constant 0 : index
    %c0_52 = arith.constant 0 : index
    %72 = vector.load %arg6[%c3_50, %c0_51, %c0_52] : memref<9x4x4xf32, #tpu.memory_space<vmem>>, vector<1x4x4xf32>
    %73 = vector.shape_cast %72 : vector<1x4x4xf32> to vector<4x4xf32>
    %74 = vector.extract_strided_slice %57 {offsets = [0, 20], sizes = [4, 156], strides = [1, 1]} : vector<4x198xf32> to vector<4x156xf32>
    %cst_53 = arith.constant dense<0.000000e+00> : vector<4x156xf32>
    %75 = tpu.matmul %73, %74, %cst_53 {dimension_numbers = #tpu.dot_dimension_numbers<[1], [0], [0], [1], [0, 0, 1, 1], [], []>} : vector<4x4xf32>, vector<4x156xf32>, vector<4x156xf32> -> vector<4x156xf32>
    %76 = arith.addf %71, %75 : vector<4x156xf32>
    %c4_54 = arith.constant 4 : index
    %c0_55 = arith.constant 0 : index
    %c0_56 = arith.constant 0 : index
    %77 = vector.load %arg6[%c4_54, %c0_55, %c0_56] : memref<9x4x4xf32, #tpu.memory_space<vmem>>, vector<1x4x4xf32>
    %78 = vector.shape_cast %77 : vector<1x4x4xf32> to vector<4x4xf32>
    %79 = vector.extract_strided_slice %57 {offsets = [0, 21], sizes = [4, 156], strides = [1, 1]} : vector<4x198xf32> to vector<4x156xf32>
    %cst_57 = arith.constant dense<0.000000e+00> : vector<4x156xf32>
    %80 = tpu.matmul %78, %79, %cst_57 {dimension_numbers = #tpu.dot_dimension_numbers<[1], [0], [0], [1], [0, 0, 1, 1], [], []>} : vector<4x4xf32>, vector<4x156xf32>, vector<4x156xf32> -> vector<4x156xf32>
    %81 = arith.addf %76, %80 : vector<4x156xf32>
    %c5_58 = arith.constant 5 : index
    %c0_59 = arith.constant 0 : index
    %c0_60 = arith.constant 0 : index
    %82 = vector.load %arg6[%c5_58, %c0_59, %c0_60] : memref<9x4x4xf32, #tpu.memory_space<vmem>>, vector<1x4x4xf32>
    %83 = vector.shape_cast %82 : vector<1x4x4xf32> to vector<4x4xf32>
    %84 = vector.extract_strided_slice %57 {offsets = [0, 22], sizes = [4, 156], strides = [1, 1]} : vector<4x198xf32> to vector<4x156xf32>
    %cst_61 = arith.constant dense<0.000000e+00> : vector<4x156xf32>
    %85 = tpu.matmul %83, %84, %cst_61 {dimension_numbers = #tpu.dot_dimension_numbers<[1], [0], [0], [1], [0, 0, 1, 1], [], []>} : vector<4x4xf32>, vector<4x156xf32>, vector<4x156xf32> -> vector<4x156xf32>
    %86 = arith.addf %81, %85 : vector<4x156xf32>
    %c6_62 = arith.constant 6 : index
    %c0_63 = arith.constant 0 : index
    %c0_64 = arith.constant 0 : index
    %87 = vector.load %arg6[%c6_62, %c0_63, %c0_64] : memref<9x4x4xf32, #tpu.memory_space<vmem>>, vector<1x4x4xf32>
    %88 = vector.shape_cast %87 : vector<1x4x4xf32> to vector<4x4xf32>
    %89 = vector.extract_strided_slice %57 {offsets = [0, 40], sizes = [4, 156], strides = [1, 1]} : vector<4x198xf32> to vector<4x156xf32>
    %cst_65 = arith.constant dense<0.000000e+00> : vector<4x156xf32>
    %90 = tpu.matmul %88, %89, %cst_65 {dimension_numbers = #tpu.dot_dimension_numbers<[1], [0], [0], [1], [0, 0, 1, 1], [], []>} : vector<4x4xf32>, vector<4x156xf32>, vector<4x156xf32> -> vector<4x156xf32>
    %91 = arith.addf %86, %90 : vector<4x156xf32>
    %c7_66 = arith.constant 7 : index
    %c0_67 = arith.constant 0 : index
    %c0_68 = arith.constant 0 : index
    %92 = vector.load %arg6[%c7_66, %c0_67, %c0_68] : memref<9x4x4xf32, #tpu.memory_space<vmem>>, vector<1x4x4xf32>
    %93 = vector.shape_cast %92 : vector<1x4x4xf32> to vector<4x4xf32>
    %94 = vector.extract_strided_slice %57 {offsets = [0, 41], sizes = [4, 156], strides = [1, 1]} : vector<4x198xf32> to vector<4x156xf32>
    %cst_69 = arith.constant dense<0.000000e+00> : vector<4x156xf32>
    %95 = tpu.matmul %93, %94, %cst_69 {dimension_numbers = #tpu.dot_dimension_numbers<[1], [0], [0], [1], [0, 0, 1, 1], [], []>} : vector<4x4xf32>, vector<4x156xf32>, vector<4x156xf32> -> vector<4x156xf32>
    %96 = arith.addf %91, %95 : vector<4x156xf32>
    %c8_70 = arith.constant 8 : index
    %c0_71 = arith.constant 0 : index
    %c0_72 = arith.constant 0 : index
    %97 = vector.load %arg6[%c8_70, %c0_71, %c0_72] : memref<9x4x4xf32, #tpu.memory_space<vmem>>, vector<1x4x4xf32>
    %98 = vector.shape_cast %97 : vector<1x4x4xf32> to vector<4x4xf32>
    %99 = vector.extract_strided_slice %57 {offsets = [0, 42], sizes = [4, 156], strides = [1, 1]} : vector<4x198xf32> to vector<4x156xf32>
    %cst_73 = arith.constant dense<0.000000e+00> : vector<4x156xf32>
    %100 = tpu.matmul %98, %99, %cst_73 {dimension_numbers = #tpu.dot_dimension_numbers<[1], [0], [0], [1], [0, 0, 1, 1], [], []>} : vector<4x4xf32>, vector<4x156xf32>, vector<4x156xf32> -> vector<4x156xf32>
    %101 = arith.addf %96, %100 : vector<4x156xf32>
    %102 = vector.extract_strided_slice %1 {offsets = [0, 42], sizes = [4, 156], strides = [1, 1]} : vector<4x240xf32> to vector<4x156xf32>
    %c0_74 = arith.constant 0 : index
    %c0_75 = arith.constant 0 : index
    %103 = vector.load %arg7[%c0_74, %c0_75] : memref<4x1xf32, #tpu.memory_space<vmem>>, vector<4x1xf32>
    %104 = vector.broadcast %103 : vector<4x1xf32> to vector<4x156xf32>
    %105 = arith.mulf %101, %104 : vector<4x156xf32>
    %c0_76 = arith.constant 0 : index
    %c0_77 = arith.constant 0 : index
    %106 = vector.load %arg8[%c0_76, %c0_77] : memref<4x1xf32, #tpu.memory_space<vmem>>, vector<4x1xf32>
    %107 = vector.broadcast %106 : vector<4x1xf32> to vector<4x156xf32>
    %108 = arith.addf %105, %107 : vector<4x156xf32>
    %109 = arith.addf %108, %102 : vector<4x156xf32>
    %cst_78 = arith.constant 0.000000e+00 : f32
    %110 = vector.broadcast %cst_78 : f32 to vector<4x156xf32>
    %111 = arith.maximumf %109, %110 : vector<4x156xf32>
    %c0_79 = arith.constant 0 : index
    %c0_80 = arith.constant 0 : index
    %c0_81 = arith.constant 0 : index
    %c0_82 = arith.constant 0 : index
    %112 = vector.load %arg10[%c0_79, %c0_80, %c0_81, %c0_82] : memref<1x1x4x156xf32, #tpu.memory_space<vmem>>, vector<1x1x4x156xf32>
    %113 = vector.shape_cast %112 : vector<1x1x4x156xf32> to vector<4x156xf32>
    %114 = vector.shape_cast %111 : vector<4x156xf32> to vector<1x1x4x156xf32>
    tpu.vector_store %arg10[%c0_79, %c0_80, %c0_81, %c0_82], %114 {strides = array<i32>} : memref<1x1x4x156xf32, #tpu.memory_space<vmem>>, vector<1x1x4x156xf32>,
    return
  }
  func.func @transform_0(%arg0: i32, %arg1: i32) -> (i32, i32, i32, i32) {
    %c0_i32 = arith.constant 0 : i32
    %c0_i32_0 = arith.constant 0 : i32
    %c0_i32_1 = arith.constant 0 : i32
    return %arg0, %arg1, %c0_i32, %c0_i32_0 : i32, i32, i32, i32
  }
  func.func @transform_1(%arg0: i32, %arg1: i32) -> (i32, i32, i32) {
    %c0_i32 = arith.constant 0 : i32
    %c0_i32_0 = arith.constant 0 : i32
    %c0_i32_1 = arith.constant 0 : i32
    %c0_i32_2 = arith.constant 0 : i32
    return %c0_i32, %c0_i32_0, %c0_i32_1 : i32, i32, i32
  }
  func.func @transform_2(%arg0: i32, %arg1: i32) -> (i32, i32) {
    %c0_i32 = arith.constant 0 : i32
    %c0_i32_0 = arith.constant 0 : i32
    %c0_i32_1 = arith.constant 0 : i32
    return %c0_i32, %c0_i32_0 : i32, i32
  }
  func.func @transform_3(%arg0: i32, %arg1: i32) -> (i32, i32) {
    %c0_i32 = arith.constant 0 : i32
    %c0_i32_0 = arith.constant 0 : i32
    %c0_i32_1 = arith.constant 0 : i32
    return %c0_i32, %c0_i32_0 : i32, i32
  }
  func.func @transform_4(%arg0: i32, %arg1: i32) -> (i32, i32, i32) {
    %c0_i32 = arith.constant 0 : i32
    %c0_i32_0 = arith.constant 0 : i32
    %c0_i32_1 = arith.constant 0 : i32
    %c0_i32_2 = arith.constant 0 : i32
    return %c0_i32, %c0_i32_0, %c0_i32_1 : i32, i32, i32
  }
  func.func @transform_5(%arg0: i32, %arg1: i32) -> (i32, i32) {
    %c0_i32 = arith.constant 0 : i32
    %c0_i32_0 = arith.constant 0 : i32
    %c0_i32_1 = arith.constant 0 : i32
    return %c0_i32, %c0_i32_0 : i32, i32
  }
  func.func @transform_6(%arg0: i32, %arg1: i32) -> (i32, i32) {
    %c0_i32 = arith.constant 0 : i32
    %c0_i32_0 = arith.constant 0 : i32
    %c0_i32_1 = arith.constant 0 : i32
    return %c0_i32, %c0_i32_0 : i32, i32
  }
  func.func @transform_7(%arg0: i32, %arg1: i32) -> (i32, i32, i32) {
    %c0_i32 = arith.constant 0 : i32
    %c0_i32_0 = arith.constant 0 : i32
    %c0_i32_1 = arith.constant 0 : i32
    return %arg1, %c0_i32, %c0_i32_0 : i32, i32, i32
  }
  func.func @transform_8(%arg0: i32, %arg1: i32) -> (i32, i32, i32, i32) {
    %c0_i32 = arith.constant 0 : i32
    %c0_i32_0 = arith.constant 0 : i32
    %c0_i32_1 = arith.constant 0 : i32
    return %arg0, %arg1, %c0_i32, %c0_i32_0 : i32, i32, i32, i32
  }
}

</mosaic_0001>

<llo_original>
// kernel: tpu_custom_call.1
$region0: #{tpu_custom_call.1}
  #allocation0 [shape = 'u32[]', space=smem, size = 0x4, offset = 0x4, fixed_abs, tag = 'smem constant byte address 0x4 - core index']
  #allocation1 [shape = 'u32[144,128]{1,0:T(1,128)}', space=vmem, size = 0x12000, scoped, tag = 'internal scratch']
  %s0 = inlined_call_operand.vmem [shape: f32[2,2,4,240], index: 0, kind: input, shape index: {}]
  %s1 = inlined_call_operand.vmem [shape: f32[9,4,4], index: 1, kind: input, shape index: {}]
  %s2 = inlined_call_operand.vmem [shape: f32[4,1], index: 2, kind: input, shape index: {}]
  %s3 = inlined_call_operand.vmem [shape: f32[4,1], index: 3, kind: input, shape index: {}]
  %s4 = inlined_call_operand.vmem [shape: f32[9,4,4], index: 4, kind: input, shape index: {}]
  %s5 = inlined_call_operand.vmem [shape: f32[4,1], index: 5, kind: input, shape index: {}]
  %s6 = inlined_call_operand.vmem [shape: f32[4,1], index: 6, kind: input, shape index: {}]
  %s7 = inlined_call_operand.vmem [shape: f32[2,1,198], index: 7, kind: input, shape index: {}]
  %s8 = inlined_call_operand.hbm [shape: f32[2,2,4,156], index: 8, kind: output, shape index: {}]
  %s9 = sld [smem:[#allocation0]]
  $region65: #{tpu_custom_call.1} parent=0
    _
  %s11 = ssub.s32 1, %s9
  %s12 = scalar_select 0, %s11, %s9
  $region1: #{tpu_custom_call.1} parent=0
    #allocation2 [shape = 'u8[8192]{0}', space=vmem, size = 0x2000, scoped, tag = 'output window, operand 0']
    #allocation3 [shape = 's32[2]{0}', space=sflag, size = 0x8, scoped, tag = 'scoped memory for tpu_custom_call.1']
    %13 = vsyncpa [#allocation3], 0
    %s14 = scalar_lea.sflag [#allocation3], 1
    %15 = vsyncpa %s14, 0
    loop: start=0, step=1, limit=6
    $region2: #{tpu_custom_call.1} parent=1 // loop_pre_header
      _
    $region3: #{tpu_custom_call.1} parent=1 // loop_header
      %s17 = sphi 0, %s21
      %p18 = scmp.ge.s32.totalorder %s17, 6
      %s24 = sphi 0, %s36
      %s25 = sphi 0, %s32
      %s26 = sphi 0, %s24
      %s27 = sphi 0, %s25
      %s28 = sphi 0, %s26
      %s29 = sphi 0, %s27
      %s41 = sphi 0, %s43
      %s44 = sphi 0, %s41
      %s45 = sphi 0, %s44
      %s61 = sphi 0, %s45
      %s65 = sphi 0, %s65
      %s67 = sphi 0, %s65
      %s68 = sphi 0, %s67
      %s82 = sphi 0, %s68
      %s86 = sphi 0, %s86
      %s88 = sphi 0, %s86
      %s89 = sphi 0, %s88
      %s103 = sphi 0, %s89
      %s107 = sphi 0, %s107
      %s109 = sphi 0, %s107
      %s110 = sphi 0, %s109
      %s124 = sphi 0, %s110
      %s128 = sphi 0, %s128
      %s130 = sphi 0, %s128
      %s131 = sphi 0, %s130
      %s145 = sphi 0, %s131
      %s149 = sphi 0, %s149
      %s151 = sphi 0, %s149
      %s152 = sphi 0, %s151
      %s166 = sphi 0, %s152
      %s170 = sphi 0, %s170
      %s172 = sphi 0, %s170
      %s173 = sphi 0, %s172
      %s187 = sphi 0, %s173
      %s193 = sphi 0, %s195
      %s196 = sphi 0, %s193
      %s197 = sphi 0, %s196
      %s213 = sphi 0, %s197
      %s221 = sphi 0, %s223
      %s224 = sphi 0, %s221
      %s225 = sphi 0, %s224
      %s241 = sphi 0, %s225
    $region4: #{tpu_custom_call.1} parent=1 // loop_header_branch
      %20 = sbr.rel (%p18) target = $region8
    $region5: #{tpu_custom_call.1} parent=1 // loop_body
      %s22 = ssub.s32 %s17, 1
      %s23 = ssub.s32 %s17, 2
      %s30 = sadd.s32 1, %s25
      %p31 = scmp.ge.s32.totalorder %s30, 2
      %s32 = scalar_select %p31, 0, %s30
      %s33 = sadd.s32 1, %s24
      %s34 = scalar_select %p31, %s33, %s24
      %p35 = scmp.ge.s32.totalorder %s34, 2
      %s36 = scalar_select %p35, 0, %s34
      %s37 = ssub.s32 %s24, %s36
      %s38 = ssub.s32 %s25, %s32
      %s39 = sor.u32 %s37, %s38
      %p40 = scmp.eq.s32.totalorder %s39, 0
      %s42 = sadd.s32 %s41, 1
      %s43 = scalar_select %p40, %s41, %s42
      %p46 = pneg %p40
      %p47 = scmp.eq.s32.totalorder %s17, 3
      %p48 = por %p46, %p47
      %p49 = scmp.ne.s32.totalorder %s41, %s44
      %p50 = scmp.eq.s32.totalorder %s17, 0
      %p51 = por %p49, %p50
      %p52 = scmp.ne.s32.totalorder %s41, %s44
      %p53 = scmp.eq.s32.totalorder %s22, 3
      %p54 = por %p52, %p53
      %p55 = scmp.ne.s32.totalorder %s44, %s45
      %p56 = scmp.eq.s32.totalorder %s22, 0
      %p57 = por %p55, %p56
      %p58 = scmp.ne.s32.totalorder %s44, %s45
      %p59 = scmp.eq.s32.totalorder %s23, 3
      %p60 = por %p58, %p59
      %p62 = scmp.ne.s32.totalorder %s45, %s61
      %p63 = scmp.eq.s32.totalorder %s23, 0
      %p64 = por %p62, %p63
      %s66 = sadd.s32 %s65, 1
      %p69 = scmp.eq.s32.totalorder %s17, 3
      %p70 = scmp.ne.s32.totalorder %s65, %s67
      %p71 = scmp.eq.s32.totalorder %s17, 0
      %p72 = por %p70, %p71
      %p73 = scmp.ne.s32.totalorder %s65, %s67
      %p74 = scmp.eq.s32.totalorder %s22, 3
      %p75 = por %p73, %p74
      %p76 = scmp.ne.s32.totalorder %s67, %s68
      %p77 = scmp.eq.s32.totalorder %s22, 0
      %p78 = por %p76, %p77
      %p79 = scmp.ne.s32.totalorder %s67, %s68
      %p80 = scmp.eq.s32.totalorder %s23, 3
      %p81 = por %p79, %p80
      %p83 = scmp.ne.s32.totalorder %s68, %s82
      %p84 = scmp.eq.s32.totalorder %s23, 0
      %p85 = por %p83, %p84
      %s87 = sadd.s32 %s86, 1
      %p90 = scmp.eq.s32.totalorder %s17, 3
      %p91 = scmp.ne.s32.totalorder %s86, %s88
      %p92 = scmp.eq.s32.totalorder %s17, 0
      %p93 = por %p91, %p92
      %p94 = scmp.ne.s32.totalorder %s86, %s88
      %p95 = scmp.eq.s32.totalorder %s22, 3
      %p96 = por %p94, %p95
      %p97 = scmp.ne.s32.totalorder %s88, %s89
      %p98 = scmp.eq.s32.totalorder %s22, 0
      %p99 = por %p97, %p98
      %p100 = scmp.ne.s32.totalorder %s88, %s89
      %p101 = scmp.eq.s32.totalorder %s23, 3
      %p102 = por %p100, %p101
      %p104 = scmp.ne.s32.totalorder %s89, %s103
      %p105 = scmp.eq.s32.totalorder %s23, 0
      %p106 = por %p104, %p105
      %s108 = sadd.s32 %s107, 1
      %p111 = scmp.eq.s32.totalorder %s17, 3
      %p112 = scmp.ne.s32.totalorder %s107, %s109
      %p113 = scmp.eq.s32.totalorder %s17, 0
      %p114 = por %p112, %p113
      %p115 = scmp.ne.s32.totalorder %s107, %s109
      %p116 = scmp.eq.s32.totalorder %s22, 3
      %p117 = por %p115, %p116
      %p118 = scmp.ne.s32.totalorder %s109, %s110
      %p119 = scmp.eq.s32.totalorder %s22, 0
      %p120 = por %p118, %p119
      %p121 = scmp.ne.s32.totalorder %s109, %s110
      %p122 = scmp.eq.s32.totalorder %s23, 3
      %p123 = por %p121, %p122
      %p125 = scmp.ne.s32.totalorder %s110, %s124
      %p126 = scmp.eq.s32.totalorder %s23, 0
      %p127 = por %p125, %p126
      %s129 = sadd.s32 %s128, 1
      %p132 = scmp.eq.s32.totalorder %s17, 3
      %p133 = scmp.ne.s32.totalorder %s128, %s130
      %p134 = scmp.eq.s32.totalorder %s17, 0
      %p135 = por %p133, %p134
      %p136 = scmp.ne.s32.totalorder %s128, %s130
      %p137 = scmp.eq.s32.totalorder %s22, 3
      %p138 = por %p136, %p137
      %p139 = scmp.ne.s32.totalorder %s130, %s131
      %p140 = scmp.eq.s32.totalorder %s22, 0
      %p141 = por %p139, %p140
      %p142 = scmp.ne.s32.totalorder %s130, %s131
      %p143 = scmp.eq.s32.totalorder %s23, 3
      %p144 = por %p142, %p143
      %p146 = scmp.ne.s32.totalorder %s131, %s145
      %p147 = scmp.eq.s32.totalorder %s23, 0
      %p148 = por %p146, %p147
      %s150 = sadd.s32 %s149, 1
      %p153 = scmp.eq.s32.totalorder %s17, 3
      %p154 = scmp.ne.s32.totalorder %s149, %s151
      %p155 = scmp.eq.s32.totalorder %s17, 0
      %p156 = por %p154, %p155
      %p157 = scmp.ne.s32.totalorder %s149, %s151
      %p158 = scmp.eq.s32.totalorder %s22, 3
      %p159 = por %p157, %p158
      %p160 = scmp.ne.s32.totalorder %s151, %s152
      %p161 = scmp.eq.s32.totalorder %s22, 0
      %p162 = por %p160, %p161
      %p163 = scmp.ne.s32.totalorder %s151, %s152
      %p164 = scmp.eq.s32.totalorder %s23, 3
      %p165 = por %p163, %p164
      %p167 = scmp.ne.s32.totalorder %s152, %s166
      %p168 = scmp.eq.s32.totalorder %s23, 0
      %p169 = por %p167, %p168
      %s171 = sadd.s32 %s170, 1
      %p174 = scmp.eq.s32.totalorder %s17, 3
      %p175 = scmp.ne.s32.totalorder %s170, %s172
      %p176 = scmp.eq.s32.totalorder %s17, 0
      %p177 = por %p175, %p176
      %p178 = scmp.ne.s32.totalorder %s170, %s172
      %p179 = scmp.eq.s32.totalorder %s22, 3
      %p180 = por %p178, %p179
      %p181 = scmp.ne.s32.totalorder %s172, %s173
      %p182 = scmp.eq.s32.totalorder %s22, 0
      %p183 = por %p181, %p182
      %p184 = scmp.ne.s32.totalorder %s172, %s173
      %p185 = scmp.eq.s32.totalorder %s23, 3
      %p186 = por %p184, %p185
      %p188 = scmp.ne.s32.totalorder %s173, %s187
      %p189 = scmp.eq.s32.totalorder %s23, 0
      %p190 = por %p188, %p189
      %s191 = ssub.s32 %s25, %s32
      %p192 = scmp.eq.s32.totalorder %s191, 0
      %s194 = sadd.s32 %s193, 1
      %s195 = scalar_select %p192, %s193, %s194
      %p198 = pneg %p192
      %p199 = scmp.eq.s32.totalorder %s17, 3
      %p200 = por %p198, %p199
      %p201 = scmp.ne.s32.totalorder %s193, %s196
      %p202 = scmp.eq.s32.totalorder %s17, 0
      %p203 = por %p201, %p202
      %p204 = scmp.ne.s32.totalorder %s193, %s196
      %p205 = scmp.eq.s32.totalorder %s22, 3
      %p206 = por %p204, %p205
      %p207 = scmp.ne.s32.totalorder %s196, %s197
      %p208 = scmp.eq.s32.totalorder %s22, 0
      %p209 = por %p207, %p208
      %p210 = scmp.ne.s32.totalorder %s196, %s197
      %p211 = scmp.eq.s32.totalorder %s23, 3
      %p212 = por %p210, %p211
      %p214 = scmp.ne.s32.totalorder %s197, %s213
      %p215 = scmp.eq.s32.totalorder %s23, 0
      %p216 = por %p214, %p215
      %s217 = ssub.s32 %s24, %s36
      %s218 = ssub.s32 %s25, %s32
      %s219 = sor.u32 %s217, %s218
      %p220 = scmp.eq.s32.totalorder %s219, 0
      %s222 = sadd.s32 %s221, 1
      %s223 = scalar_select %p220, %s221, %s222
      %p226 = pneg %p220
      %p227 = scmp.eq.s32.totalorder %s17, 3
      %p228 = por %p226, %p227
      %p229 = scmp.ne.s32.totalorder %s221, %s224
      %p230 = scmp.eq.s32.totalorder %s17, 0
      %p231 = por %p229, %p230
      %p232 = scmp.ne.s32.totalorder %s221, %s224
      %p233 = scmp.eq.s32.totalorder %s22, 3
      %p234 = por %p232, %p233
      %p235 = scmp.ne.s32.totalorder %s224, %s225
      %p236 = scmp.eq.s32.totalorder %s22, 0
      %p237 = por %p235, %p236
      %p238 = scmp.ne.s32.totalorder %s224, %s225
      %p239 = scmp.eq.s32.totalorder %s23, 3
      %p240 = por %p238, %p239
      %p242 = scmp.ne.s32.totalorder %s225, %s241
      %p243 = scmp.eq.s32.totalorder %s23, 0
      %p244 = por %p242, %p243
      %p245 = scmp.le.s32.totalorder 1, %s17
      %p246 = scmp.lt.s32.totalorder %s17, 5
      %p247 = pnand %p245, %p246
      %p248 = pneg %p247
      // Predicated region
      $region9: #{tpu_custom_call.1} parent=5 // pred_check
        _
      $region10: #{tpu_custom_call.1} parent=5 // pred_check_branch
        %250 = sbr.rel (%p247) target = $region12
      $region11: #{tpu_custom_call.1} parent=5 // pred_region
        %s251 = ssub.s32 %s17, 1
        // Predicated region
        $region13: #{tpu_custom_call.1} parent=11 // pred_check
          %p252 = pneg %p78
        $region14: #{tpu_custom_call.1} parent=11 // pred_check_branch
          %254 = sbr.rel (%p252) target = $region16
        $region15: #{tpu_custom_call.1} parent=11 // pred_region
          _
        $region16: #{tpu_custom_call.1} parent=11 // pred_fallthru
          _
        // Predicated region
        $region17: #{tpu_custom_call.1} parent=11 // pred_check
          %p255 = pneg %p99
        $region18: #{tpu_custom_call.1} parent=11 // pred_check_branch
          %257 = sbr.rel (%p255) target = $region20
        $region19: #{tpu_custom_call.1} parent=11 // pred_region
          _
        $region20: #{tpu_custom_call.1} parent=11 // pred_fallthru
          _
        // Predicated region
        $region21: #{tpu_custom_call.1} parent=11 // pred_check
          %p258 = pneg %p120
        $region22: #{tpu_custom_call.1} parent=11 // pred_check_branch
          %260 = sbr.rel (%p258) target = $region24
        $region23: #{tpu_custom_call.1} parent=11 // pred_region
          _
        $region24: #{tpu_custom_call.1} parent=11 // pred_fallthru
          _
        // Predicated region
        $region25: #{tpu_custom_call.1} parent=11 // pred_check
          %p261 = pneg %p141
        $region26: #{tpu_custom_call.1} parent=11 // pred_check_branch
          %263 = sbr.rel (%p261) target = $region28
        $region27: #{tpu_custom_call.1} parent=11 // pred_region
          _
        $region28: #{tpu_custom_call.1} parent=11 // pred_fallthru
          _
        // Predicated region
        $region29: #{tpu_custom_call.1} parent=11 // pred_check
          %p264 = pneg %p162
        $region30: #{tpu_custom_call.1} parent=11 // pred_check_branch
          %266 = sbr.rel (%p264) target = $region32
        $region31: #{tpu_custom_call.1} parent=11 // pred_region
          _
        $region32: #{tpu_custom_call.1} parent=11 // pred_fallthru
          _
        // Predicated region
        $region33: #{tpu_custom_call.1} parent=11 // pred_check
          %p267 = pneg %p183
        $region34: #{tpu_custom_call.1} parent=11 // pred_check_branch
          %269 = sbr.rel (%p267) target = $region36
        $region35: #{tpu_custom_call.1} parent=11 // pred_region
          _
        $region36: #{tpu_custom_call.1} parent=11 // pred_fallthru
          _
      $region12: #{tpu_custom_call.1} parent=5 // pred_fallthru
        _
      %p270 = scmp.lt.s32.totalorder %s17, 4
      // Predicated region
      $region37: #{tpu_custom_call.1} parent=5 // pred_check
        %p271 = pneg %p270
      $region38: #{tpu_custom_call.1} parent=5 // pred_check_branch
        %273 = sbr.rel (%p271) target = $region40
      $region39: #{tpu_custom_call.1} parent=5 // pred_region
        // Predicated region
        $region41: #{tpu_custom_call.1} parent=39 // pred_check
          %p274 = pneg %p51
        $region42: #{tpu_custom_call.1} parent=39 // pred_check_branch
          %276 = sbr.rel (%p274) target = $region44
        $region43: #{tpu_custom_call.1} parent=39 // pred_region
          %p277 = scmp.lt.s32.totalorder %s24, 1
          %s278 = scalar_select %p277, %s24, 1
          %p279 = scmp.lt.s32.totalorder %s25, 1
          %s280 = scalar_select %p279, %s25, 1
          %s281 = smul.addr %s280, 2
          %s282 = smul.addr %s278, 4
          %s283 = sadd.s32 %s281, %s282
          %s284 = smul.addr %s283, 4
          %s285 = scalar_lea.vmem %s0, %s284
        $region44: #{tpu_custom_call.1} parent=39 // pred_fallthru
          _
        // Predicated region
        $region45: #{tpu_custom_call.1} parent=39 // pred_check
          %p286 = pneg %p203
        $region46: #{tpu_custom_call.1} parent=39 // pred_check_branch
          %288 = sbr.rel (%p286) target = $region48
        $region47: #{tpu_custom_call.1} parent=39 // pred_region
          %p289 = scmp.lt.s32.totalorder %s25, 1
          %s290 = scalar_select %p289, %s25, 1
          %s291 = smul.addr %s290, 2
          %s292 = scalar_lea.vmem %s7, %s291
        $region48: #{tpu_custom_call.1} parent=39 // pred_fallthru
          _
      $region40: #{tpu_custom_call.1} parent=5 // pred_fallthru
        _
      %p293 = scmp.le.s32.totalorder 1, %s17
      %p294 = scmp.lt.s32.totalorder %s17, 5
      %p295 = pnand %p293, %p294
      %p296 = pneg %p295
      // Predicated region
      $region49: #{tpu_custom_call.1} parent=5 // pred_check
        _
      $region50: #{tpu_custom_call.1} parent=5 // pred_check_branch
        %298 = sbr.rel (%p295) target = $region52
      $region51: #{tpu_custom_call.1} parent=5 // pred_region
        %s299 = ssub.s32 %s17, 1
        %p300 = scmp.lt.s32.totalorder %s26, 1
        %s301 = scalar_select %p300, %s26, 1
        %p302 = scmp.lt.s32.totalorder %s27, 1
        %s303 = scalar_select %p302, %s27, 1
        %s304 = smul.addr %s303, 2
        %s305 = smul.addr %s301, 4
        %s306 = sadd.s32 %s304, %s305
        %s307 = smul.addr %s306, 4
        %s308 = scalar_lea.vmem %s0, %s307
        %p309 = pneg %p57
        %p310 = pneg %p54
        %p311 = pneg %p78
        %p312 = pneg %p75
        %p313 = pneg %p99
        %p314 = pneg %p96
        %p315 = pneg %p120
        %p316 = pneg %p117
        %p317 = pneg %p141
        %p318 = pneg %p138
        %p319 = pneg %p162
        %p320 = pneg %p159
        %p321 = pneg %p183
        %p322 = pneg %p180
        %p323 = scmp.lt.s32.totalorder %s27, 1
        %s324 = scalar_select %p323, %s27, 1
        %s325 = smul.addr %s324, 2
        %s326 = scalar_lea.vmem %s7, %s325
        %p327 = pneg %p209
        %p328 = pneg %p206
        %p329 = pneg %p237
        %p330 = pneg %p234
        %s331 = sand.u32 %s224, 1
        %s332 = scalar_lea.sflag [#allocation3], %s331
        %s333 = sand.u32 %s224, 1
        %s334 = smul.addr %s333, 8
        %s335 = scalar_lea.vmem [#allocation2], %s334
        %p336 = scmp.lt.s32.totalorder %s26, 1
        %s337 = scalar_select %p336, %s26, 1
        %p338 = scmp.lt.s32.totalorder %s27, 1
        %s339 = scalar_select %p338, %s27, 1
        %s340 = smul.addr %s339, 2
        %s341 = smul.addr %s337, 4
        %s342 = sadd.s32 %s340, %s341
        %s343 = smul.addr %s342, 4
        %s344 = scalar_lea.vmem %s0, %s343
        %p345 = scmp.lt.s32.totalorder %s27, 1
        %s346 = scalar_select %p345, %s27, 1
        %s347 = smul.addr %s346, 2
        %s348 = scalar_lea.vmem %s7, %s347
        %v349 = vld [vmem:[%s344] sm:$0xff]
        %v350 = vld [vmem:[%s348] sm:$0x3]
        %v351 = vld [vmem:[%s1] sm:$0xf]
        %s352 = scalar_lea.vmem %s1, 4
        %v353 = vld [vmem:[%s352] sm:$0xf]
        %v355 = vcombine.high %v349, %v349
        %356 = vrot.lane.b32.xlu0 %v349, 127
        %v357 = vpop.permute.xlu0 %356
        %358 = vrot.lane.b32.xlu0 %v355, 127
        %v359 = vpop.permute.xlu0 %358
        %vm360 = vcmask 1039360
        %v361 = vsel %vm360, %v357, %v359
        %vm362 = vcmask 31744
        %v364 = vsel %vm362, %v353, 0
        %vm366 = vcmask 1043456
        %v367 = vsel %vm366, %v361, 0
        %v369 = vsel %vm366, %v359, 0
        %371 = vmatprep.subr.mxu0 %v369
        %372 = vmatpush1.msra.mxu0 %v367
        %373 = vmatprep.subr.mxu0 0.0
        %374 = vmatpush1.msra.mxu0 0.0
        %375 = vmatprep.subr.mxu0 0.0
        %376 = vmatpush1.msra.mxu0 0.0
        %377 = vmatprep.subr.mxu0 0.0
        %378 = vmatpush1.msra.mxu0 0.0
        %379 = vmatprep.subr.mxu0 0.0
        %380 = vmatpush1.msra.mxu0 0.0
        %381 = vmatprep.subr.mxu0 0.0
        %382 = vmatpush1.msra.mxu0 0.0
        %383 = vmatprep.subr.mxu0 0.0
        %384 = vmatpush1.msra.mxu0 0.0
        %385 = vmatprep.subr.mxu0 0.0
        %386 = vmatpush1.msra.mxu0 0.0
        %387 = vmatprep.subr.mxu0 0.0
        %388 = vmatpush1.msra.mxu0 0.0
        %389 = vmatprep.subr.mxu0 0.0
        %390 = vmatpush1.msra.mxu0 0.0
        %391 = vmatprep.subr.mxu0 0.0
        %392 = vmatpush1.msra.mxu0 0.0
        %393 = vmatprep.subr.mxu0 0.0
        %394 = vmatpush1.msra.mxu0 0.0
        %395 = vmatprep.subr.mxu0 0.0
        %396 = vmatpush1.msra.mxu0 0.0
        %397 = vmatprep.subr.mxu0 0.0
        %398 = vmatpush1.msra.mxu0 0.0
        %399 = vmatprep.subr.mxu0 0.0
        %400 = vmatpush1.msra.mxu0 0.0
        %401 = vmatprep.subr.mxu0 0.0
        %402 = vmatpush1.msra.mxu0 0.0
        %403 = vmatprep.subr.mxu0 0.0
        %404 = vmatpush1.msra.mxu0 0.0
        %405 = vmatprep.subr.mxu0 0.0
        %406 = vmatpush1.msra.mxu0 0.0
        %407 = vmatprep.subr.mxu0 0.0
        %408 = vmatpush1.msra.mxu0 0.0
        %409 = vmatprep.subr.mxu0 0.0
        %410 = vmatpush1.msra.mxu0 0.0
        %411 = vmatprep.subr.mxu0 0.0
        %412 = vmatpush1.msra.mxu0 0.0
        %413 = vmatprep.subr.mxu0 0.0
        %414 = vmatpush1.msra.mxu0 0.0
        %415 = vmatprep.subr.mxu0 0.0
        %416 = vmatpush1.msra.mxu0 0.0
        %417 = vmatprep.subr.mxu0 0.0
        %418 = vmatpush1.msra.mxu0 0.0
        %419 = vmatprep.subr.mxu0 0.0
        %420 = vmatpush1.msra.mxu0 0.0
        %421 = vmatprep.subr.mxu0 0.0
        %422 = vmatpush1.msra.mxu0 0.0
        %423 = vmatprep.subr.mxu0 0.0
        %424 = vmatpush1.msra.mxu0 0.0
        %425 = vmatprep.subr.mxu0 0.0
        %426 = vmatpush1.msra.mxu0 0.0
        %427 = vmatprep.subr.mxu0 0.0
        %428 = vmatpush1.msra.mxu0 0.0
        %429 = vmatprep.subr.mxu0 0.0
        %430 = vmatpush1.msra.mxu0 0.0
        %431 = vmatprep.subr.mxu0 0.0
        %432 = vmatpush1.msra.mxu0 0.0
        %433 = vmatprep.subr.mxu0 0.0
        %434 = vmatpush1.msra.mxu0 0.0
        %435 = vmatprep.mubr.f32.mxu0 0.0
        %436 = vmatmul.mubr.f32.gmra.mrb[0].mxu0 %v364
        %v437 = vpop.f32.mrb[0].mxu0
        %v438 = vadd.f32 0.0, %v437
        %v439 = vpop.f32.mrb[0].mxu0
        %v440 = vadd.f32 0.0, %v439
        %441 = vdwg.mxu0
        %v443 = vsel %vm362, %v351, 0
        %v445 = vsel %vm366, %v349, 0
        %v447 = vsel %vm366, %v355, 0
        %449 = vmatprep.subr.mxu0 %v447
        %450 = vmatpush1.msra.mxu0 %v445
        %451 = vmatprep.subr.mxu0 0.0
        %452 = vmatpush1.msra.mxu0 0.0
        %453 = vmatprep.subr.mxu0 0.0
        %454 = vmatpush1.msra.mxu0 0.0
        %455 = vmatprep.subr.mxu0 0.0
        %456 = vmatpush1.msra.mxu0 0.0
        %457 = vmatprep.subr.mxu0 0.0
        %458 = vmatpush1.msra.mxu0 0.0
        %459 = vmatprep.subr.mxu0 0.0
        %460 = vmatpush1.msra.mxu0 0.0
        %461 = vmatprep.subr.mxu0 0.0
        %462 = vmatpush1.msra.mxu0 0.0
        %463 = vmatprep.subr.mxu0 0.0
        %464 = vmatpush1.msra.mxu0 0.0
        %465 = vmatprep.subr.mxu0 0.0
        %466 = vmatpush1.msra.mxu0 0.0
        %467 = vmatprep.subr.mxu0 0.0
        %468 = vmatpush1.msra.mxu0 0.0
        %469 = vmatprep.subr.mxu0 0.0
        %470 = vmatpush1.msra.mxu0 0.0
        %471 = vmatprep.subr.mxu0 0.0
        %472 = vmatpush1.msra.mxu0 0.0
        %473 = vmatprep.subr.mxu0 0.0
        %474 = vmatpush1.msra.mxu0 0.0
        %475 = vmatprep.subr.mxu0 0.0
        %476 = vmatpush1.msra.mxu0 0.0
        %477 = vmatprep.subr.mxu0 0.0
        %478 = vmatpush1.msra.mxu0 0.0
        %479 = vmatprep.subr.mxu0 0.0
        %480 = vmatpush1.msra.mxu0 0.0
        %481 = vmatprep.subr.mxu0 0.0
        %482 = vmatpush1.msra.mxu0 0.0
        %483 = vmatprep.subr.mxu0 0.0
        %484 = vmatpush1.msra.mxu0 0.0
        %485 = vmatprep.subr.mxu0 0.0
        %486 = vmatpush1.msra.mxu0 0.0
        %487 = vmatprep.subr.mxu0 0.0
        %488 = vmatpush1.msra.mxu0 0.0
        %489 = vmatprep.subr.mxu0 0.0
        %490 = vmatpush1.msra.mxu0 0.0
        %491 = vmatprep.subr.mxu0 0.0
        %492 = vmatpush1.msra.mxu0 0.0
        %493 = vmatprep.subr.mxu0 0.0
        %494 = vmatpush1.msra.mxu0 0.0
        %495 = vmatprep.subr.mxu0 0.0
        %496 = vmatpush1.msra.mxu0 0.0
        %497 = vmatprep.subr.mxu0 0.0
        %498 = vmatpush1.msra.mxu0 0.0
        %499 = vmatprep.subr.mxu0 0.0
        %500 = vmatpush1.msra.mxu0 0.0
        %501 = vmatprep.subr.mxu0 0.0
        %502 = vmatpush1.msra.mxu0 0.0
        %503 = vmatprep.subr.mxu0 0.0
        %504 = vmatpush1.msra.mxu0 0.0
        %505 = vmatprep.subr.mxu0 0.0
        %506 = vmatpush1.msra.mxu0 0.0
        %507 = vmatprep.subr.mxu0 0.0
        %508 = vmatpush1.msra.mxu0 0.0
        %509 = vmatprep.subr.mxu0 0.0
        %510 = vmatpush1.msra.mxu0 0.0
        %511 = vmatprep.subr.mxu0 0.0
        %512 = vmatpush1.msra.mxu0 0.0
        %513 = vmatprep.mubr.f32.mxu0 0.0
        %514 = vmatmul.mubr.f32.gmra.mrb[0].mxu0 %v443
        %v515 = vpop.f32.mrb[0].mxu0
        %v516 = vadd.f32 %v438, %v515
        %v517 = vpop.f32.mrb[0].mxu0
        %v518 = vadd.f32 %v440, %v517
        %519 = vdwg.mxu0
        %s520 = scalar_lea.vmem %s1, 8
        %v521 = vld [vmem:[%s520] sm:$0xf]
        %522 = vrot.lane.b32.xlu0 %v349, 126
        %v523 = vpop.permute.xlu0 %522
        %524 = vrot.lane.b32.xlu0 %v355, 126
        %v525 = vpop.permute.xlu0 %524
        %vm526 = vcmask 1031168
        %v527 = vsel %vm526, %v523, %v525
        %v529 = vsel %vm362, %v521, 0
        %v531 = vsel %vm366, %v527, 0
        %v533 = vsel %vm366, %v525, 0
        %535 = vmatprep.subr.mxu0 %v533
        %536 = vmatpush1.msra.mxu0 %v531
        %537 = vmatprep.subr.mxu0 0.0
        %538 = vmatpush1.msra.mxu0 0.0
        %539 = vmatprep.subr.mxu0 0.0
        %540 = vmatpush1.msra.mxu0 0.0
        %541 = vmatprep.subr.mxu0 0.0
        %542 = vmatpush1.msra.mxu0 0.0
        %543 = vmatprep.subr.mxu0 0.0
        %544 = vmatpush1.msra.mxu0 0.0
        %545 = vmatprep.subr.mxu0 0.0
        %546 = vmatpush1.msra.mxu0 0.0
        %547 = vmatprep.subr.mxu0 0.0
        %548 = vmatpush1.msra.mxu0 0.0
        %549 = vmatprep.subr.mxu0 0.0
        %550 = vmatpush1.msra.mxu0 0.0
        %551 = vmatprep.subr.mxu0 0.0
        %552 = vmatpush1.msra.mxu0 0.0
        %553 = vmatprep.subr.mxu0 0.0
        %554 = vmatpush1.msra.mxu0 0.0
        %555 = vmatprep.subr.mxu0 0.0
        %556 = vmatpush1.msra.mxu0 0.0
        %557 = vmatprep.subr.mxu0 0.0
        %558 = vmatpush1.msra.mxu0 0.0
        %559 = vmatprep.subr.mxu0 0.0
        %560 = vmatpush1.msra.mxu0 0.0
        %561 = vmatprep.subr.mxu0 0.0
        %562 = vmatpush1.msra.mxu0 0.0
        %563 = vmatprep.subr.mxu0 0.0
        %564 = vmatpush1.msra.mxu0 0.0
        %565 = vmatprep.subr.mxu0 0.0
        %566 = vmatpush1.msra.mxu0 0.0
        %567 = vmatprep.subr.mxu0 0.0
        %568 = vmatpush1.msra.mxu0 0.0
        %569 = vmatprep.subr.mxu0 0.0
        %570 = vmatpush1.msra.mxu0 0.0
        %571 = vmatprep.subr.mxu0 0.0
        %572 = vmatpush1.msra.mxu0 0.0
        %573 = vmatprep.subr.mxu0 0.0
        %574 = vmatpush1.msra.mxu0 0.0
        %575 = vmatprep.subr.mxu0 0.0
        %576 = vmatpush1.msra.mxu0 0.0
        %577 = vmatprep.subr.mxu0 0.0
        %578 = vmatpush1.msra.mxu0 0.0
        %579 = vmatprep.subr.mxu0 0.0
        %580 = vmatpush1.msra.mxu0 0.0
        %581 = vmatprep.subr.mxu0 0.0
        %582 = vmatpush1.msra.mxu0 0.0
        %583 = vmatprep.subr.mxu0 0.0
        %584 = vmatpush1.msra.mxu0 0.0
        %585 = vmatprep.subr.mxu0 0.0
        %586 = vmatpush1.msra.mxu0 0.0
        %587 = vmatprep.subr.mxu0 0.0
        %588 = vmatpush1.msra.mxu0 0.0
        %589 = vmatprep.subr.mxu0 0.0
        %590 = vmatpush1.msra.mxu0 0.0
        %591 = vmatprep.subr.mxu0 0.0
        %592 = vmatpush1.msra.mxu0 0.0
        %593 = vmatprep.subr.mxu0 0.0
        %594 = vmatpush1.msra.mxu0 0.0
        %595 = vmatprep.subr.mxu0 0.0
        %596 = vmatpush1.msra.mxu0 0.0
        %597 = vmatprep.subr.mxu0 0.0
        %598 = vmatpush1.msra.mxu0 0.0
        %599 = vmatprep.mubr.f32.mxu0 0.0
        %600 = vmatmul.mubr.f32.gmra.mrb[0].mxu0 %v529
        %v601 = vpop.f32.mrb[0].mxu0
        %v602 = vadd.f32 0.0, %v601
        %v603 = vpop.f32.mrb[0].mxu0
        %v604 = vadd.f32 0.0, %v603
        %605 = vdwg.mxu0
        %v606 = vadd.f32 %v516, %v602
        %v607 = vadd.f32 %v518, %v604
        %s608 = scalar_lea.vmem %s1, 12
        %v609 = vld [vmem:[%s608] sm:$0xf]
        %610 = vrot.lane.b32.xlu0 %v349, 108
        %v611 = vpop.permute.xlu0 %610
        %612 = vrot.lane.b32.xlu0 %v355, 108
        %v613 = vpop.permute.xlu0 %612
        %vm614 = vcmask 883712
        %v615 = vsel %vm614, %v611, %v613
        %v617 = vsel %vm362, %v609, 0
        %v619 = vsel %vm366, %v615, 0
        %v621 = vsel %vm366, %v613, 0
        %623 = vmatprep.subr.mxu0 %v621
        %624 = vmatpush1.msra.mxu0 %v619
        %625 = vmatprep.subr.mxu0 0.0
        %626 = vmatpush1.msra.mxu0 0.0
        %627 = vmatprep.subr.mxu0 0.0
        %628 = vmatpush1.msra.mxu0 0.0
        %629 = vmatprep.subr.mxu0 0.0
        %630 = vmatpush1.msra.mxu0 0.0
        %631 = vmatprep.subr.mxu0 0.0
        %632 = vmatpush1.msra.mxu0 0.0
        %633 = vmatprep.subr.mxu0 0.0
        %634 = vmatpush1.msra.mxu0 0.0
        %635 = vmatprep.subr.mxu0 0.0
        %636 = vmatpush1.msra.mxu0 0.0
        %637 = vmatprep.subr.mxu0 0.0
        %638 = vmatpush1.msra.mxu0 0.0
        %639 = vmatprep.subr.mxu0 0.0
        %640 = vmatpush1.msra.mxu0 0.0
        %641 = vmatprep.subr.mxu0 0.0
        %642 = vmatpush1.msra.mxu0 0.0
        %643 = vmatprep.subr.mxu0 0.0
        %644 = vmatpush1.msra.mxu0 0.0
        %645 = vmatprep.subr.mxu0 0.0
        %646 = vmatpush1.msra.mxu0 0.0
        %647 = vmatprep.subr.mxu0 0.0
        %648 = vmatpush1.msra.mxu0 0.0
        %649 = vmatprep.subr.mxu0 0.0
        %650 = vmatpush1.msra.mxu0 0.0
        %651 = vmatprep.subr.mxu0 0.0
        %652 = vmatpush1.msra.mxu0 0.0
        %653 = vmatprep.subr.mxu0 0.0
        %654 = vmatpush1.msra.mxu0 0.0
        %655 = vmatprep.subr.mxu0 0.0
        %656 = vmatpush1.msra.mxu0 0.0
        %657 = vmatprep.subr.mxu0 0.0
        %658 = vmatpush1.msra.mxu0 0.0
        %659 = vmatprep.subr.mxu0 0.0
        %660 = vmatpush1.msra.mxu0 0.0
        %661 = vmatprep.subr.mxu0 0.0
        %662 = vmatpush1.msra.mxu0 0.0
        %663 = vmatprep.subr.mxu0 0.0
        %664 = vmatpush1.msra.mxu0 0.0
        %665 = vmatprep.subr.mxu0 0.0
        %666 = vmatpush1.msra.mxu0 0.0
        %667 = vmatprep.subr.mxu0 0.0
        %668 = vmatpush1.msra.mxu0 0.0
        %669 = vmatprep.subr.mxu0 0.0
        %670 = vmatpush1.msra.mxu0 0.0
        %671 = vmatprep.subr.mxu0 0.0
        %672 = vmatpush1.msra.mxu0 0.0
        %673 = vmatprep.subr.mxu0 0.0
        %674 = vmatpush1.msra.mxu0 0.0
        %675 = vmatprep.subr.mxu0 0.0
        %676 = vmatpush1.msra.mxu0 0.0
        %677 = vmatprep.subr.mxu0 0.0
        %678 = vmatpush1.msra.mxu0 0.0
        %679 = vmatprep.subr.mxu0 0.0
        %680 = vmatpush1.msra.mxu0 0.0
        %681 = vmatprep.subr.mxu0 0.0
        %682 = vmatpush1.msra.mxu0 0.0
        %683 = vmatprep.subr.mxu0 0.0
        %684 = vmatpush1.msra.mxu0 0.0
        %685 = vmatprep.subr.mxu0 0.0
        %686 = vmatpush1.msra.mxu0 0.0
        %687 = vmatprep.mubr.f32.mxu0 0.0
        %688 = vmatmul.mubr.f32.gmra.mrb[0].mxu0 %v617
        %v689 = vpop.f32.mrb[0].mxu0
        %v690 = vadd.f32 0.0, %v689
        %v691 = vpop.f32.mrb[0].mxu0
        %v692 = vadd.f32 0.0, %v691
        %693 = vdwg.mxu0
        %v694 = vadd.f32 %v606, %v690
        %v695 = vadd.f32 %v607, %v692
        %s696 = scalar_lea.vmem %s1, 16
        %v697 = vld [vmem:[%s696] sm:$0xf]
        %698 = vrot.lane.b32.xlu0 %v349, 107
        %v699 = vpop.permute.xlu0 %698
        %700 = vrot.lane.b32.xlu0 %v355, 107
        %v701 = vpop.permute.xlu0 %700
        %vm702 = vcmask 875520
        %v703 = vsel %vm702, %v699, %v701
        %v705 = vsel %vm362, %v697, 0
        %v707 = vsel %vm366, %v703, 0
        %v709 = vsel %vm366, %v701, 0
        %711 = vmatprep.subr.mxu0 %v709
        %712 = vmatpush1.msra.mxu0 %v707
        %713 = vmatprep.subr.mxu0 0.0
        %714 = vmatpush1.msra.mxu0 0.0
        %715 = vmatprep.subr.mxu0 0.0
        %716 = vmatpush1.msra.mxu0 0.0
        %717 = vmatprep.subr.mxu0 0.0
        %718 = vmatpush1.msra.mxu0 0.0
        %719 = vmatprep.subr.mxu0 0.0
        %720 = vmatpush1.msra.mxu0 0.0
        %721 = vmatprep.subr.mxu0 0.0
        %722 = vmatpush1.msra.mxu0 0.0
        %723 = vmatprep.subr.mxu0 0.0
        %724 = vmatpush1.msra.mxu0 0.0
        %725 = vmatprep.subr.mxu0 0.0
        %726 = vmatpush1.msra.mxu0 0.0
        %727 = vmatprep.subr.mxu0 0.0
        %728 = vmatpush1.msra.mxu0 0.0
        %729 = vmatprep.subr.mxu0 0.0
        %730 = vmatpush1.msra.mxu0 0.0
        %731 = vmatprep.subr.mxu0 0.0
        %732 = vmatpush1.msra.mxu0 0.0
        %733 = vmatprep.subr.mxu0 0.0
        %734 = vmatpush1.msra.mxu0 0.0
        %735 = vmatprep.subr.mxu0 0.0
        %736 = vmatpush1.msra.mxu0 0.0
        %737 = vmatprep.subr.mxu0 0.0
        %738 = vmatpush1.msra.mxu0 0.0
        %739 = vmatprep.subr.mxu0 0.0
        %740 = vmatpush1.msra.mxu0 0.0
        %741 = vmatprep.subr.mxu0 0.0
        %742 = vmatpush1.msra.mxu0 0.0
        %743 = vmatprep.subr.mxu0 0.0
        %744 = vmatpush1.msra.mxu0 0.0
        %745 = vmatprep.subr.mxu0 0.0
        %746 = vmatpush1.msra.mxu0 0.0
        %747 = vmatprep.subr.mxu0 0.0
        %748 = vmatpush1.msra.mxu0 0.0
        %749 = vmatprep.subr.mxu0 0.0
        %750 = vmatpush1.msra.mxu0 0.0
        %751 = vmatprep.subr.mxu0 0.0
        %752 = vmatpush1.msra.mxu0 0.0
        %753 = vmatprep.subr.mxu0 0.0
        %754 = vmatpush1.msra.mxu0 0.0
        %755 = vmatprep.subr.mxu0 0.0
        %756 = vmatpush1.msra.mxu0 0.0
        %757 = vmatprep.subr.mxu0 0.0
        %758 = vmatpush1.msra.mxu0 0.0
        %759 = vmatprep.subr.mxu0 0.0
        %760 = vmatpush1.msra.mxu0 0.0
        %761 = vmatprep.subr.mxu0 0.0
        %762 = vmatpush1.msra.mxu0 0.0
        %763 = vmatprep.subr.mxu0 0.0
        %764 = vmatpush1.msra.mxu0 0.0
        %765 = vmatprep.subr.mxu0 0.0
        %766 = vmatpush1.msra.mxu0 0.0
        %767 = vmatprep.subr.mxu0 0.0
        %768 = vmatpush1.msra.mxu0 0.0
        %769 = vmatprep.subr.mxu0 0.0
        %770 = vmatpush1.msra.mxu0 0.0
        %771 = vmatprep.subr.mxu0 0.0
        %772 = vmatpush1.msra.mxu0 0.0
        %773 = vmatprep.subr.mxu0 0.0
        %774 = vmatpush1.msra.mxu0 0.0
        %775 = vmatprep.mubr.f32.mxu0 0.0
        %776 = vmatmul.mubr.f32.gmra.mrb[0].mxu0 %v705
        %v777 = vpop.f32.mrb[0].mxu0
        %v778 = vadd.f32 0.0, %v777
        %v779 = vpop.f32.mrb[0].mxu0
        %v780 = vadd.f32 0.0, %v779
        %781 = vdwg.mxu0
        %v782 = vadd.f32 %v694, %v778
        %v783 = vadd.f32 %v695, %v780
        %s784 = scalar_lea.vmem %s1, 20
        %v785 = vld [vmem:[%s784] sm:$0xf]
        %786 = vrot.lane.b32.xlu0 %v349, 106
        %v787 = vpop.permute.xlu0 %786
        %788 = vrot.lane.b32.xlu0 %v355, 106
        %v789 = vpop.permute.xlu0 %788
        %vm790 = vcmask 867328
        %v791 = vsel %vm790, %v787, %v789
        %v793 = vsel %vm362, %v785, 0
        %v795 = vsel %vm366, %v791, 0
        %v797 = vsel %vm366, %v789, 0
        %799 = vmatprep.subr.mxu0 %v797
        %800 = vmatpush1.msra.mxu0 %v795
        %801 = vmatprep.subr.mxu0 0.0
        %802 = vmatpush1.msra.mxu0 0.0
        %803 = vmatprep.subr.mxu0 0.0
        %804 = vmatpush1.msra.mxu0 0.0
        %805 = vmatprep.subr.mxu0 0.0
        %806 = vmatpush1.msra.mxu0 0.0
        %807 = vmatprep.subr.mxu0 0.0
        %808 = vmatpush1.msra.mxu0 0.0
        %809 = vmatprep.subr.mxu0 0.0
        %810 = vmatpush1.msra.mxu0 0.0
        %811 = vmatprep.subr.mxu0 0.0
        %812 = vmatpush1.msra.mxu0 0.0
        %813 = vmatprep.subr.mxu0 0.0
        %814 = vmatpush1.msra.mxu0 0.0
        %815 = vmatprep.subr.mxu0 0.0
        %816 = vmatpush1.msra.mxu0 0.0
        %817 = vmatprep.subr.mxu0 0.0
        %818 = vmatpush1.msra.mxu0 0.0
        %819 = vmatprep.subr.mxu0 0.0
        %820 = vmatpush1.msra.mxu0 0.0
        %821 = vmatprep.subr.mxu0 0.0
        %822 = vmatpush1.msra.mxu0 0.0
        %823 = vmatprep.subr.mxu0 0.0
        %824 = vmatpush1.msra.mxu0 0.0
        %825 = vmatprep.subr.mxu0 0.0
        %826 = vmatpush1.msra.mxu0 0.0
        %827 = vmatprep.subr.mxu0 0.0
        %828 = vmatpush1.msra.mxu0 0.0
        %829 = vmatprep.subr.mxu0 0.0
        %830 = vmatpush1.msra.mxu0 0.0
        %831 = vmatprep.subr.mxu0 0.0
        %832 = vmatpush1.msra.mxu0 0.0
        %833 = vmatprep.subr.mxu0 0.0
        %834 = vmatpush1.msra.mxu0 0.0
        %835 = vmatprep.subr.mxu0 0.0
        %836 = vmatpush1.msra.mxu0 0.0
        %837 = vmatprep.subr.mxu0 0.0
        %838 = vmatpush1.msra.mxu0 0.0
        %839 = vmatprep.subr.mxu0 0.0
        %840 = vmatpush1.msra.mxu0 0.0
        %841 = vmatprep.subr.mxu0 0.0
        %842 = vmatpush1.msra.mxu0 0.0
        %843 = vmatprep.subr.mxu0 0.0
        %844 = vmatpush1.msra.mxu0 0.0
        %845 = vmatprep.subr.mxu0 0.0
        %846 = vmatpush1.msra.mxu0 0.0
        %847 = vmatprep.subr.mxu0 0.0
        %848 = vmatpush1.msra.mxu0 0.0
        %849 = vmatprep.subr.mxu0 0.0
        %850 = vmatpush1.msra.mxu0 0.0
        %851 = vmatprep.subr.mxu0 0.0
        %852 = vmatpush1.msra.mxu0 0.0
        %853 = vmatprep.subr.mxu0 0.0
        %854 = vmatpush1.msra.mxu0 0.0
        %855 = vmatprep.subr.mxu0 0.0
        %856 = vmatpush1.msra.mxu0 0.0
        %857 = vmatprep.subr.mxu0 0.0
        %858 = vmatpush1.msra.mxu0 0.0
        %859 = vmatprep.subr.mxu0 0.0
        %860 = vmatpush1.msra.mxu0 0.0
        %861 = vmatprep.subr.mxu0 0.0
        %862 = vmatpush1.msra.mxu0 0.0
        %863 = vmatprep.mubr.f32.mxu0 0.0
        %864 = vmatmul.mubr.f32.gmra.mrb[0].mxu0 %v793
        %v865 = vpop.f32.mrb[0].mxu0
        %v866 = vadd.f32 0.0, %v865
        %v867 = vpop.f32.mrb[0].mxu0
        %v868 = vadd.f32 0.0, %v867
        %869 = vdwg.mxu0
        %v870 = vadd.f32 %v782, %v866
        %v871 = vadd.f32 %v783, %v868
        %s872 = scalar_lea.vmem %s1, 24
        %v873 = vld [vmem:[%s872] sm:$0xf]
        %874 = vrot.lane.b32.xlu0 %v349, 88
        %v875 = vpop.permute.xlu0 %874
        %876 = vrot.lane.b32.xlu0 %v355, 88
        %v877 = vpop.permute.xlu0 %876
        %vm878 = vcmask 719872
        %v879 = vsel %vm878, %v875, %v877
        %v881 = vsel %vm362, %v873, 0
        %v883 = vsel %vm366, %v879, 0
        %v885 = vsel %vm366, %v877, 0
        %887 = vmatprep.subr.mxu0 %v885
        %888 = vmatpush1.msra.mxu0 %v883
        %889 = vmatprep.subr.mxu0 0.0
        %890 = vmatpush1.msra.mxu0 0.0
        %891 = vmatprep.subr.mxu0 0.0
        %892 = vmatpush1.msra.mxu0 0.0
        %893 = vmatprep.subr.mxu0 0.0
        %894 = vmatpush1.msra.mxu0 0.0
        %895 = vmatprep.subr.mxu0 0.0
        %896 = vmatpush1.msra.mxu0 0.0
        %897 = vmatprep.subr.mxu0 0.0
        %898 = vmatpush1.msra.mxu0 0.0
        %899 = vmatprep.subr.mxu0 0.0
        %900 = vmatpush1.msra.mxu0 0.0
        %901 = vmatprep.subr.mxu0 0.0
        %902 = vmatpush1.msra.mxu0 0.0
        %903 = vmatprep.subr.mxu0 0.0
        %904 = vmatpush1.msra.mxu0 0.0
        %905 = vmatprep.subr.mxu0 0.0
        %906 = vmatpush1.msra.mxu0 0.0
        %907 = vmatprep.subr.mxu0 0.0
        %908 = vmatpush1.msra.mxu0 0.0
        %909 = vmatprep.subr.mxu0 0.0
        %910 = vmatpush1.msra.mxu0 0.0
        %911 = vmatprep.subr.mxu0 0.0
        %912 = vmatpush1.msra.mxu0 0.0
        %913 = vmatprep.subr.mxu0 0.0
        %914 = vmatpush1.msra.mxu0 0.0
        %915 = vmatprep.subr.mxu0 0.0
        %916 = vmatpush1.msra.mxu0 0.0
        %917 = vmatprep.subr.mxu0 0.0
        %918 = vmatpush1.msra.mxu0 0.0
        %919 = vmatprep.subr.mxu0 0.0
        %920 = vmatpush1.msra.mxu0 0.0
        %921 = vmatprep.subr.mxu0 0.0
        %922 = vmatpush1.msra.mxu0 0.0
        %923 = vmatprep.subr.mxu0 0.0
        %924 = vmatpush1.msra.mxu0 0.0
        %925 = vmatprep.subr.mxu0 0.0
        %926 = vmatpush1.msra.mxu0 0.0
        %927 = vmatprep.subr.mxu0 0.0
        %928 = vmatpush1.msra.mxu0 0.0
        %929 = vmatprep.subr.mxu0 0.0
        %930 = vmatpush1.msra.mxu0 0.0
        %931 = vmatprep.subr.mxu0 0.0
        %932 = vmatpush1.msra.mxu0 0.0
        %933 = vmatprep.subr.mxu0 0.0
        %934 = vmatpush1.msra.mxu0 0.0
        %935 = vmatprep.subr.mxu0 0.0
        %936 = vmatpush1.msra.mxu0 0.0
        %937 = vmatprep.subr.mxu0 0.0
        %938 = vmatpush1.msra.mxu0 0.0
        %939 = vmatprep.subr.mxu0 0.0
        %940 = vmatpush1.msra.mxu0 0.0
        %941 = vmatprep.subr.mxu0 0.0
        %942 = vmatpush1.msra.mxu0 0.0
        %943 = vmatprep.subr.mxu0 0.0
        %944 = vmatpush1.msra.mxu0 0.0
        %945 = vmatprep.subr.mxu0 0.0
        %946 = vmatpush1.msra.mxu0 0.0
        %947 = vmatprep.subr.mxu0 0.0
        %948 = vmatpush1.msra.mxu0 0.0
        %949 = vmatprep.subr.mxu0 0.0
        %950 = vmatpush1.msra.mxu0 0.0
        %951 = vmatprep.mubr.f32.mxu0 0.0
        %952 = vmatmul.mubr.f32.gmra.mrb[0].mxu0 %v881
        %v953 = vpop.f32.mrb[0].mxu0
        %v954 = vadd.f32 0.0, %v953
        %v955 = vpop.f32.mrb[0].mxu0
        %v956 = vadd.f32 0.0, %v955
        %957 = vdwg.mxu0
        %v958 = vadd.f32 %v870, %v954
        %v959 = vadd.f32 %v871, %v956
        %s960 = scalar_lea.vmem %s1, 28
        %v961 = vld [vmem:[%s960] sm:$0xf]
        %962 = vrot.lane.b32.xlu0 %v349, 87
        %v963 = vpop.permute.xlu0 %962
        %964 = vrot.lane.b32.xlu0 %v355, 87
        %v965 = vpop.permute.xlu0 %964
        %vm966 = vcmask 711680
        %v967 = vsel %vm966, %v963, %v965
        %v969 = vsel %vm362, %v961, 0
        %v971 = vsel %vm366, %v967, 0
        %v973 = vsel %vm366, %v965, 0
        %975 = vmatprep.subr.mxu0 %v973
        %976 = vmatpush1.msra.mxu0 %v971
        %977 = vmatprep.subr.mxu0 0.0
        %978 = vmatpush1.msra.mxu0 0.0
        %979 = vmatprep.subr.mxu0 0.0
        %980 = vmatpush1.msra.mxu0 0.0
        %981 = vmatprep.subr.mxu0 0.0
        %982 = vmatpush1.msra.mxu0 0.0
        %983 = vmatprep.subr.mxu0 0.0
        %984 = vmatpush1.msra.mxu0 0.0
        %985 = vmatprep.subr.mxu0 0.0
        %986 = vmatpush1.msra.mxu0 0.0
        %987 = vmatprep.subr.mxu0 0.0
        %988 = vmatpush1.msra.mxu0 0.0
        %989 = vmatprep.subr.mxu0 0.0
        %990 = vmatpush1.msra.mxu0 0.0
        %991 = vmatprep.subr.mxu0 0.0
        %992 = vmatpush1.msra.mxu0 0.0
        %993 = vmatprep.subr.mxu0 0.0
        %994 = vmatpush1.msra.mxu0 0.0
        %995 = vmatprep.subr.mxu0 0.0
        %996 = vmatpush1.msra.mxu0 0.0
        %997 = vmatprep.subr.mxu0 0.0
        %998 = vmatpush1.msra.mxu0 0.0
        %999 = vmatprep.subr.mxu0 0.0
        %1000 = vmatpush1.msra.mxu0 0.0
        %1001 = vmatprep.subr.mxu0 0.0
        %1002 = vmatpush1.msra.mxu0 0.0
        %1003 = vmatprep.subr.mxu0 0.0
        %1004 = vmatpush1.msra.mxu0 0.0
        %1005 = vmatprep.subr.mxu0 0.0
        %1006 = vmatpush1.msra.mxu0 0.0
        %1007 = vmatprep.subr.mxu0 0.0
        %1008 = vmatpush1.msra.mxu0 0.0
        %1009 = vmatprep.subr.mxu0 0.0
        %1010 = vmatpush1.msra.mxu0 0.0
        %1011 = vmatprep.subr.mxu0 0.0
        %1012 = vmatpush1.msra.mxu0 0.0
        %1013 = vmatprep.subr.mxu0 0.0
        %1014 = vmatpush1.msra.mxu0 0.0
        %1015 = vmatprep.subr.mxu0 0.0
        %1016 = vmatpush1.msra.mxu0 0.0
        %1017 = vmatprep.subr.mxu0 0.0
        %1018 = vmatpush1.msra.mxu0 0.0
        %1019 = vmatprep.subr.mxu0 0.0
        %1020 = vmatpush1.msra.mxu0 0.0
        %1021 = vmatprep.subr.mxu0 0.0
        %1022 = vmatpush1.msra.mxu0 0.0
        %1023 = vmatprep.subr.mxu0 0.0
        %1024 = vmatpush1.msra.mxu0 0.0
        %1025 = vmatprep.subr.mxu0 0.0
        %1026 = vmatpush1.msra.mxu0 0.0
        %1027 = vmatprep.subr.mxu0 0.0
        %1028 = vmatpush1.msra.mxu0 0.0
        %1029 = vmatprep.subr.mxu0 0.0
        %1030 = vmatpush1.msra.mxu0 0.0
        %1031 = vmatprep.subr.mxu0 0.0
        %1032 = vmatpush1.msra.mxu0 0.0
        %1033 = vmatprep.subr.mxu0 0.0
        %1034 = vmatpush1.msra.mxu0 0.0
        %1035 = vmatprep.subr.mxu0 0.0
        %1036 = vmatpush1.msra.mxu0 0.0
        %1037 = vmatprep.subr.mxu0 0.0
        %1038 = vmatpush1.msra.mxu0 0.0
        %1039 = vmatprep.mubr.f32.mxu0 0.0
        %1040 = vmatmul.mubr.f32.gmra.mrb[0].mxu0 %v969
        %v1041 = vpop.f32.mrb[0].mxu0
        %v1042 = vadd.f32 0.0, %v1041
        %v1043 = vpop.f32.mrb[0].mxu0
        %v1044 = vadd.f32 0.0, %v1043
        %1045 = vdwg.mxu0
        %v1046 = vadd.f32 %v958, %v1042
        %v1047 = vadd.f32 %v959, %v1044
        %s1048 = scalar_lea.vmem %s1, 32
        %v1049 = vld [vmem:[%s1048] sm:$0xf]
        %1050 = vrot.lane.b32.xlu0 %v349, 86
        %v1051 = vpop.permute.xlu0 %1050
        %1052 = vrot.lane.b32.xlu0 %v355, 86
        %v1053 = vpop.permute.xlu0 %1052
        %vm1054 = vcmask 703488
        %v1055 = vsel %vm1054, %v1051, %v1053
        %v1057 = vsel %vm362, %v1049, 0
        %v1059 = vsel %vm366, %v1055, 0
        %v1061 = vsel %vm366, %v1053, 0
        %1063 = vmatprep.subr.mxu0 %v1061
        %1064 = vmatpush1.msra.mxu0 %v1059
        %1065 = vmatprep.subr.mxu0 0.0
        %1066 = vmatpush1.msra.mxu0 0.0
        %1067 = vmatprep.subr.mxu0 0.0
        %1068 = vmatpush1.msra.mxu0 0.0
        %1069 = vmatprep.subr.mxu0 0.0
        %1070 = vmatpush1.msra.mxu0 0.0
        %1071 = vmatprep.subr.mxu0 0.0
        %1072 = vmatpush1.msra.mxu0 0.0
        %1073 = vmatprep.subr.mxu0 0.0
        %1074 = vmatpush1.msra.mxu0 0.0
        %1075 = vmatprep.subr.mxu0 0.0
        %1076 = vmatpush1.msra.mxu0 0.0
        %1077 = vmatprep.subr.mxu0 0.0
        %1078 = vmatpush1.msra.mxu0 0.0
        %1079 = vmatprep.subr.mxu0 0.0
        %1080 = vmatpush1.msra.mxu0 0.0
        %1081 = vmatprep.subr.mxu0 0.0
        %1082 = vmatpush1.msra.mxu0 0.0
        %1083 = vmatprep.subr.mxu0 0.0
        %1084 = vmatpush1.msra.mxu0 0.0
        %1085 = vmatprep.subr.mxu0 0.0
        %1086 = vmatpush1.msra.mxu0 0.0
        %1087 = vmatprep.subr.mxu0 0.0
        %1088 = vmatpush1.msra.mxu0 0.0
        %1089 = vmatprep.subr.mxu0 0.0
        %1090 = vmatpush1.msra.mxu0 0.0
        %1091 = vmatprep.subr.mxu0 0.0
        %1092 = vmatpush1.msra.mxu0 0.0
        %1093 = vmatprep.subr.mxu0 0.0
        %1094 = vmatpush1.msra.mxu0 0.0
        %1095 = vmatprep.subr.mxu0 0.0
        %1096 = vmatpush1.msra.mxu0 0.0
        %1097 = vmatprep.subr.mxu0 0.0
        %1098 = vmatpush1.msra.mxu0 0.0
        %1099 = vmatprep.subr.mxu0 0.0
        %1100 = vmatpush1.msra.mxu0 0.0
        %1101 = vmatprep.subr.mxu0 0.0
        %1102 = vmatpush1.msra.mxu0 0.0
        %1103 = vmatprep.subr.mxu0 0.0
        %1104 = vmatpush1.msra.mxu0 0.0
        %1105 = vmatprep.subr.mxu0 0.0
        %1106 = vmatpush1.msra.mxu0 0.0
        %1107 = vmatprep.subr.mxu0 0.0
        %1108 = vmatpush1.msra.mxu0 0.0
        %1109 = vmatprep.subr.mxu0 0.0
        %1110 = vmatpush1.msra.mxu0 0.0
        %1111 = vmatprep.subr.mxu0 0.0
        %1112 = vmatpush1.msra.mxu0 0.0
        %1113 = vmatprep.subr.mxu0 0.0
        %1114 = vmatpush1.msra.mxu0 0.0
        %1115 = vmatprep.subr.mxu0 0.0
        %1116 = vmatpush1.msra.mxu0 0.0
        %1117 = vmatprep.subr.mxu0 0.0
        %1118 = vmatpush1.msra.mxu0 0.0
        %1119 = vmatprep.subr.mxu0 0.0
        %1120 = vmatpush1.msra.mxu0 0.0
        %1121 = vmatprep.subr.mxu0 0.0
        %1122 = vmatpush1.msra.mxu0 0.0
        %1123 = vmatprep.subr.mxu0 0.0
        %1124 = vmatpush1.msra.mxu0 0.0
        %1125 = vmatprep.subr.mxu0 0.0
        %1126 = vmatpush1.msra.mxu0 0.0
        %1127 = vmatprep.mubr.f32.mxu0 0.0
        %1128 = vmatmul.mubr.f32.gmra.mrb[0].mxu0 %v1057
        %v1129 = vpop.f32.mrb[0].mxu0
        %v1130 = vadd.f32 0.0, %v1129
        %v1131 = vpop.f32.mrb[0].mxu0
        %v1132 = vadd.f32 0.0, %v1131
        %1133 = vdwg.mxu0
        %v1134 = vadd.f32 %v1046, %v1130
        %v1135 = vadd.f32 %v1047, %v1132
        %v1136 = vld [vmem:[%s2] sm:$0xf]
        %1138 = vset.pattern.permute.xlu0 0
        %1139 = vperm.xlu0 %1138, %v1136
        %v1140 = vpop.permute.xlu0 %1139
        %v1142 = vmul.f32 %v1134, %v1140
        %v1143 = vmul.f32 %v1135, %v1140
        %v1144 = vld [vmem:[%s3] sm:$0xf]
        %1146 = vset.pattern.permute.xlu0 0
        %1147 = vperm.xlu0 %1146, %v1144
        %v1148 = vpop.permute.xlu0 %1147
        %v1150 = vadd.f32 %v1142, %v1148
        %v1151 = vadd.f32 %v1143, %v1148
        %v1152 = vmax.f32 %v1150, 0.0
        %v1153 = vmax.f32 %v1151, 0.0
        %v1155 = vlaneseq
        %v1156 = vshrl.u32 %v1155, 7
        %v1157 = vsub.s32 0, %v1156
        %v1158 = vrot.slane %v350, %v1157
        %v1159 = vlaneseq
        %v1160 = vshrl.u32 %v1159, 7
        %v1161 = vsub.s32 1, %v1160
        %v1162 = vrot.slane %v350, %v1161
        %v1165 = vmul.f32 %v1152, %v1158
        %v1166 = vmul.f32 %v1153, %v1162
        %v1167 = vld [vmem:[%s4] sm:$0xf]
        %s1168 = scalar_lea.vmem %s4, 4
        %v1169 = vld [vmem:[%s1168] sm:$0xf]
        %1172 = vrot.lane.b32.xlu0 %v1165, 127
        %v1173 = vpop.permute.xlu0 %1172
        %1174 = vrot.lane.b32.xlu0 %v1166, 127
        %v1175 = vpop.permute.xlu0 %1174
        %v1176 = vsel %vm360, %v1173, %v1175
        %v1178 = vsel %vm362, %v1169, 0
        %v1180 = vsel %vm366, %v1176, 0
        %v1182 = vsel %vm366, %v1175, 0
        %1184 = vmatprep.subr.mxu0 %v1182
        %1185 = vmatpush1.msra.mxu0 %v1180
        %1186 = vmatprep.subr.mxu0 0.0
        %1187 = vmatpush1.msra.mxu0 0.0
        %1188 = vmatprep.subr.mxu0 0.0
        %1189 = vmatpush1.msra.mxu0 0.0
        %1190 = vmatprep.subr.mxu0 0.0
        %1191 = vmatpush1.msra.mxu0 0.0
        %1192 = vmatprep.subr.mxu0 0.0
        %1193 = vmatpush1.msra.mxu0 0.0
        %1194 = vmatprep.subr.mxu0 0.0
        %1195 = vmatpush1.msra.mxu0 0.0
        %1196 = vmatprep.subr.mxu0 0.0
        %1197 = vmatpush1.msra.mxu0 0.0
        %1198 = vmatprep.subr.mxu0 0.0
        %1199 = vmatpush1.msra.mxu0 0.0
        %1200 = vmatprep.subr.mxu0 0.0
        %1201 = vmatpush1.msra.mxu0 0.0
        %1202 = vmatprep.subr.mxu0 0.0
        %1203 = vmatpush1.msra.mxu0 0.0
        %1204 = vmatprep.subr.mxu0 0.0
        %1205 = vmatpush1.msra.mxu0 0.0
        %1206 = vmatprep.subr.mxu0 0.0
        %1207 = vmatpush1.msra.mxu0 0.0
        %1208 = vmatprep.subr.mxu0 0.0
        %1209 = vmatpush1.msra.mxu0 0.0
        %1210 = vmatprep.subr.mxu0 0.0
        %1211 = vmatpush1.msra.mxu0 0.0
        %1212 = vmatprep.subr.mxu0 0.0
        %1213 = vmatpush1.msra.mxu0 0.0
        %1214 = vmatprep.subr.mxu0 0.0
        %1215 = vmatpush1.msra.mxu0 0.0
        %1216 = vmatprep.subr.mxu0 0.0
        %1217 = vmatpush1.msra.mxu0 0.0
        %1218 = vmatprep.subr.mxu0 0.0
        %1219 = vmatpush1.msra.mxu0 0.0
        %1220 = vmatprep.subr.mxu0 0.0
        %1221 = vmatpush1.msra.mxu0 0.0
        %1222 = vmatprep.subr.mxu0 0.0
        %1223 = vmatpush1.msra.mxu0 0.0
        %1224 = vmatprep.subr.mxu0 0.0
        %1225 = vmatpush1.msra.mxu0 0.0
        %1226 = vmatprep.subr.mxu0 0.0
        %1227 = vmatpush1.msra.mxu0 0.0
        %1228 = vmatprep.subr.mxu0 0.0
        %1229 = vmatpush1.msra.mxu0 0.0
        %1230 = vmatprep.subr.mxu0 0.0
        %1231 = vmatpush1.msra.mxu0 0.0
        %1232 = vmatprep.subr.mxu0 0.0
        %1233 = vmatpush1.msra.mxu0 0.0
        %1234 = vmatprep.subr.mxu0 0.0
        %1235 = vmatpush1.msra.mxu0 0.0
        %1236 = vmatprep.subr.mxu0 0.0
        %1237 = vmatpush1.msra.mxu0 0.0
        %1238 = vmatprep.subr.mxu0 0.0
        %1239 = vmatpush1.msra.mxu0 0.0
        %1240 = vmatprep.subr.mxu0 0.0
        %1241 = vmatpush1.msra.mxu0 0.0
        %1242 = vmatprep.subr.mxu0 0.0
        %1243 = vmatpush1.msra.mxu0 0.0
        %1244 = vmatprep.subr.mxu0 0.0
        %1245 = vmatpush1.msra.mxu0 0.0
        %1246 = vmatprep.subr.mxu0 0.0
        %1247 = vmatpush1.msra.mxu0 0.0
        %1248 = vmatprep.mubr.f32.mxu0 0.0
        %1249 = vmatmul.mubr.f32.gmra.mrb[0].mxu0 %v1178
        %v1250 = vpop.f32.mrb[0].mxu0
        %v1251 = vadd.f32 0.0, %v1250
        %v1252 = vpop.f32.mrb[0].mxu0
        %v1253 = vadd.f32 0.0, %v1252
        %1254 = vdwg.mxu0
        %v1256 = vsel %vm362, %v1167, 0
        %v1258 = vsel %vm366, %v1165, 0
        %v1260 = vsel %vm366, %v1166, 0
        %1262 = vmatprep.subr.mxu0 %v1260
        %1263 = vmatpush1.msra.mxu0 %v1258
        %1264 = vmatprep.subr.mxu0 0.0
        %1265 = vmatpush1.msra.mxu0 0.0
        %1266 = vmatprep.subr.mxu0 0.0
        %1267 = vmatpush1.msra.mxu0 0.0
        %1268 = vmatprep.subr.mxu0 0.0
        %1269 = vmatpush1.msra.mxu0 0.0
        %1270 = vmatprep.subr.mxu0 0.0
        %1271 = vmatpush1.msra.mxu0 0.0
        %1272 = vmatprep.subr.mxu0 0.0
        %1273 = vmatpush1.msra.mxu0 0.0
        %1274 = vmatprep.subr.mxu0 0.0
        %1275 = vmatpush1.msra.mxu0 0.0
        %1276 = vmatprep.subr.mxu0 0.0
        %1277 = vmatpush1.msra.mxu0 0.0
        %1278 = vmatprep.subr.mxu0 0.0
        %1279 = vmatpush1.msra.mxu0 0.0
        %1280 = vmatprep.subr.mxu0 0.0
        %1281 = vmatpush1.msra.mxu0 0.0
        %1282 = vmatprep.subr.mxu0 0.0
        %1283 = vmatpush1.msra.mxu0 0.0
        %1284 = vmatprep.subr.mxu0 0.0
        %1285 = vmatpush1.msra.mxu0 0.0
        %1286 = vmatprep.subr.mxu0 0.0
        %1287 = vmatpush1.msra.mxu0 0.0
        %1288 = vmatprep.subr.mxu0 0.0
        %1289 = vmatpush1.msra.mxu0 0.0
        %1290 = vmatprep.subr.mxu0 0.0
        %1291 = vmatpush1.msra.mxu0 0.0
        %1292 = vmatprep.subr.mxu0 0.0
        %1293 = vmatpush1.msra.mxu0 0.0
        %1294 = vmatprep.subr.mxu0 0.0
        %1295 = vmatpush1.msra.mxu0 0.0
        %1296 = vmatprep.subr.mxu0 0.0
        %1297 = vmatpush1.msra.mxu0 0.0
        %1298 = vmatprep.subr.mxu0 0.0
        %1299 = vmatpush1.msra.mxu0 0.0
        %1300 = vmatprep.subr.mxu0 0.0
        %1301 = vmatpush1.msra.mxu0 0.0
        %1302 = vmatprep.subr.mxu0 0.0
        %1303 = vmatpush1.msra.mxu0 0.0
        %1304 = vmatprep.subr.mxu0 0.0
        %1305 = vmatpush1.msra.mxu0 0.0
        %1306 = vmatprep.subr.mxu0 0.0
        %1307 = vmatpush1.msra.mxu0 0.0
        %1308 = vmatprep.subr.mxu0 0.0
        %1309 = vmatpush1.msra.mxu0 0.0
        %1310 = vmatprep.subr.mxu0 0.0
        %1311 = vmatpush1.msra.mxu0 0.0
        %1312 = vmatprep.subr.mxu0 0.0
        %1313 = vmatpush1.msra.mxu0 0.0
        %1314 = vmatprep.subr.mxu0 0.0
        %1315 = vmatpush1.msra.mxu0 0.0
        %1316 = vmatprep.subr.mxu0 0.0
        %1317 = vmatpush1.msra.mxu0 0.0
        %1318 = vmatprep.subr.mxu0 0.0
        %1319 = vmatpush1.msra.mxu0 0.0
        %1320 = vmatprep.subr.mxu0 0.0
        %1321 = vmatpush1.msra.mxu0 0.0
        %1322 = vmatprep.subr.mxu0 0.0
        %1323 = vmatpush1.msra.mxu0 0.0
        %1324 = vmatprep.subr.mxu0 0.0
        %1325 = vmatpush1.msra.mxu0 0.0
        %1326 = vmatprep.mubr.f32.mxu0 0.0
        %1327 = vmatmul.mubr.f32.gmra.mrb[0].mxu0 %v1256
        %v1328 = vpop.f32.mrb[0].mxu0
        %v1329 = vadd.f32 %v1251, %v1328
        %v1330 = vpop.f32.mrb[0].mxu0
        %v1331 = vadd.f32 %v1253, %v1330
        %1332 = vdwg.mxu0
        %s1333 = scalar_lea.vmem %s4, 8
        %v1334 = vld [vmem:[%s1333] sm:$0xf]
        %1335 = vrot.lane.b32.xlu0 %v1165, 126
        %v1336 = vpop.permute.xlu0 %1335
        %1337 = vrot.lane.b32.xlu0 %v1166, 126
        %v1338 = vpop.permute.xlu0 %1337
        %v1339 = vsel %vm526, %v1336, %v1338
        %v1341 = vsel %vm362, %v1334, 0
        %v1343 = vsel %vm366, %v1339, 0
        %v1345 = vsel %vm366, %v1338, 0
        %1347 = vmatprep.subr.mxu0 %v1345
        %1348 = vmatpush1.msra.mxu0 %v1343
        %1349 = vmatprep.subr.mxu0 0.0
        %1350 = vmatpush1.msra.mxu0 0.0
        %1351 = vmatprep.subr.mxu0 0.0
        %1352 = vmatpush1.msra.mxu0 0.0
        %1353 = vmatprep.subr.mxu0 0.0
        %1354 = vmatpush1.msra.mxu0 0.0
        %1355 = vmatprep.subr.mxu0 0.0
        %1356 = vmatpush1.msra.mxu0 0.0
        %1357 = vmatprep.subr.mxu0 0.0
        %1358 = vmatpush1.msra.mxu0 0.0
        %1359 = vmatprep.subr.mxu0 0.0
        %1360 = vmatpush1.msra.mxu0 0.0
        %1361 = vmatprep.subr.mxu0 0.0
        %1362 = vmatpush1.msra.mxu0 0.0
        %1363 = vmatprep.subr.mxu0 0.0
        %1364 = vmatpush1.msra.mxu0 0.0
        %1365 = vmatprep.subr.mxu0 0.0
        %1366 = vmatpush1.msra.mxu0 0.0
        %1367 = vmatprep.subr.mxu0 0.0
        %1368 = vmatpush1.msra.mxu0 0.0
        %1369 = vmatprep.subr.mxu0 0.0
        %1370 = vmatpush1.msra.mxu0 0.0
        %1371 = vmatprep.subr.mxu0 0.0
        %1372 = vmatpush1.msra.mxu0 0.0
        %1373 = vmatprep.subr.mxu0 0.0
        %1374 = vmatpush1.msra.mxu0 0.0
        %1375 = vmatprep.subr.mxu0 0.0
        %1376 = vmatpush1.msra.mxu0 0.0
        %1377 = vmatprep.subr.mxu0 0.0
        %1378 = vmatpush1.msra.mxu0 0.0
        %1379 = vmatprep.subr.mxu0 0.0
        %1380 = vmatpush1.msra.mxu0 0.0
        %1381 = vmatprep.subr.mxu0 0.0
        %1382 = vmatpush1.msra.mxu0 0.0
        %1383 = vmatprep.subr.mxu0 0.0
        %1384 = vmatpush1.msra.mxu0 0.0
        %1385 = vmatprep.subr.mxu0 0.0
        %1386 = vmatpush1.msra.mxu0 0.0
        %1387 = vmatprep.subr.mxu0 0.0
        %1388 = vmatpush1.msra.mxu0 0.0
        %1389 = vmatprep.subr.mxu0 0.0
        %1390 = vmatpush1.msra.mxu0 0.0
        %1391 = vmatprep.subr.mxu0 0.0
        %1392 = vmatpush1.msra.mxu0 0.0
        %1393 = vmatprep.subr.mxu0 0.0
        %1394 = vmatpush1.msra.mxu0 0.0
        %1395 = vmatprep.subr.mxu0 0.0
        %1396 = vmatpush1.msra.mxu0 0.0
        %1397 = vmatprep.subr.mxu0 0.0
        %1398 = vmatpush1.msra.mxu0 0.0
        %1399 = vmatprep.subr.mxu0 0.0
        %1400 = vmatpush1.msra.mxu0 0.0
        %1401 = vmatprep.subr.mxu0 0.0
        %1402 = vmatpush1.msra.mxu0 0.0
        %1403 = vmatprep.subr.mxu0 0.0
        %1404 = vmatpush1.msra.mxu0 0.0
        %1405 = vmatprep.subr.mxu0 0.0
        %1406 = vmatpush1.msra.mxu0 0.0
        %1407 = vmatprep.subr.mxu0 0.0
        %1408 = vmatpush1.msra.mxu0 0.0
        %1409 = vmatprep.subr.mxu0 0.0
        %1410 = vmatpush1.msra.mxu0 0.0
        %1411 = vmatprep.mubr.f32.mxu0 0.0
        %1412 = vmatmul.mubr.f32.gmra.mrb[0].mxu0 %v1341
        %v1413 = vpop.f32.mrb[0].mxu0
        %v1414 = vadd.f32 0.0, %v1413
        %v1415 = vpop.f32.mrb[0].mxu0
        %v1416 = vadd.f32 0.0, %v1415
        %1417 = vdwg.mxu0
        %v1418 = vadd.f32 %v1329, %v1414
        %v1419 = vadd.f32 %v1331, %v1416
        %s1420 = scalar_lea.vmem %s4, 12
        %v1421 = vld [vmem:[%s1420] sm:$0xf]
        %1422 = vrot.lane.b32.xlu0 %v1165, 108
        %v1423 = vpop.permute.xlu0 %1422
        %1424 = vrot.lane.b32.xlu0 %v1166, 108
        %v1425 = vpop.permute.xlu0 %1424
        %v1426 = vsel %vm614, %v1423, %v1425
        %v1428 = vsel %vm362, %v1421, 0
        %v1430 = vsel %vm366, %v1426, 0
        %v1432 = vsel %vm366, %v1425, 0
        %1434 = vmatprep.subr.mxu0 %v1432
        %1435 = vmatpush1.msra.mxu0 %v1430
        %1436 = vmatprep.subr.mxu0 0.0
        %1437 = vmatpush1.msra.mxu0 0.0
        %1438 = vmatprep.subr.mxu0 0.0
        %1439 = vmatpush1.msra.mxu0 0.0
        %1440 = vmatprep.subr.mxu0 0.0
        %1441 = vmatpush1.msra.mxu0 0.0
        %1442 = vmatprep.subr.mxu0 0.0
        %1443 = vmatpush1.msra.mxu0 0.0
        %1444 = vmatprep.subr.mxu0 0.0
        %1445 = vmatpush1.msra.mxu0 0.0
        %1446 = vmatprep.subr.mxu0 0.0
        %1447 = vmatpush1.msra.mxu0 0.0
        %1448 = vmatprep.subr.mxu0 0.0
        %1449 = vmatpush1.msra.mxu0 0.0
        %1450 = vmatprep.subr.mxu0 0.0
        %1451 = vmatpush1.msra.mxu0 0.0
        %1452 = vmatprep.subr.mxu0 0.0
        %1453 = vmatpush1.msra.mxu0 0.0
        %1454 = vmatprep.subr.mxu0 0.0
        %1455 = vmatpush1.msra.mxu0 0.0
        %1456 = vmatprep.subr.mxu0 0.0
        %1457 = vmatpush1.msra.mxu0 0.0
        %1458 = vmatprep.subr.mxu0 0.0
        %1459 = vmatpush1.msra.mxu0 0.0
        %1460 = vmatprep.subr.mxu0 0.0
        %1461 = vmatpush1.msra.mxu0 0.0
        %1462 = vmatprep.subr.mxu0 0.0
        %1463 = vmatpush1.msra.mxu0 0.0
        %1464 = vmatprep.subr.mxu0 0.0
        %1465 = vmatpush1.msra.mxu0 0.0
        %1466 = vmatprep.subr.mxu0 0.0
        %1467 = vmatpush1.msra.mxu0 0.0
        %1468 = vmatprep.subr.mxu0 0.0
        %1469 = vmatpush1.msra.mxu0 0.0
        %1470 = vmatprep.subr.mxu0 0.0
        %1471 = vmatpush1.msra.mxu0 0.0
        %1472 = vmatprep.subr.mxu0 0.0
        %1473 = vmatpush1.msra.mxu0 0.0
        %1474 = vmatprep.subr.mxu0 0.0
        %1475 = vmatpush1.msra.mxu0 0.0
        %1476 = vmatprep.subr.mxu0 0.0
        %1477 = vmatpush1.msra.mxu0 0.0
        %1478 = vmatprep.subr.mxu0 0.0
        %1479 = vmatpush1.msra.mxu0 0.0
        %1480 = vmatprep.subr.mxu0 0.0
        %1481 = vmatpush1.msra.mxu0 0.0
        %1482 = vmatprep.subr.mxu0 0.0
        %1483 = vmatpush1.msra.mxu0 0.0
        %1484 = vmatprep.subr.mxu0 0.0
        %1485 = vmatpush1.msra.mxu0 0.0
        %1486 = vmatprep.subr.mxu0 0.0
        %1487 = vmatpush1.msra.mxu0 0.0
        %1488 = vmatprep.subr.mxu0 0.0
        %1489 = vmatpush1.msra.mxu0 0.0
        %1490 = vmatprep.subr.mxu0 0.0
        %1491 = vmatpush1.msra.mxu0 0.0
        %1492 = vmatprep.subr.mxu0 0.0
        %1493 = vmatpush1.msra.mxu0 0.0
        %1494 = vmatprep.subr.mxu0 0.0
        %1495 = vmatpush1.msra.mxu0 0.0
        %1496 = vmatprep.subr.mxu0 0.0
        %1497 = vmatpush1.msra.mxu0 0.0
        %1498 = vmatprep.mubr.f32.mxu0 0.0
        %1499 = vmatmul.mubr.f32.gmra.mrb[0].mxu0 %v1428
        %v1500 = vpop.f32.mrb[0].mxu0
        %v1501 = vadd.f32 0.0, %v1500
        %v1502 = vpop.f32.mrb[0].mxu0
        %v1503 = vadd.f32 0.0, %v1502
        %1504 = vdwg.mxu0
        %v1505 = vadd.f32 %v1418, %v1501
        %v1506 = vadd.f32 %v1419, %v1503
        %s1507 = scalar_lea.vmem %s4, 16
        %v1508 = vld [vmem:[%s1507] sm:$0xf]
        %1509 = vrot.lane.b32.xlu0 %v1165, 107
        %v1510 = vpop.permute.xlu0 %1509
        %1511 = vrot.lane.b32.xlu0 %v1166, 107
        %v1512 = vpop.permute.xlu0 %1511
        %v1513 = vsel %vm702, %v1510, %v1512
        %v1515 = vsel %vm362, %v1508, 0
        %v1517 = vsel %vm366, %v1513, 0
        %v1519 = vsel %vm366, %v1512, 0
        %1521 = vmatprep.subr.mxu0 %v1519
        %1522 = vmatpush1.msra.mxu0 %v1517
        %1523 = vmatprep.subr.mxu0 0.0
        %1524 = vmatpush1.msra.mxu0 0.0
        %1525 = vmatprep.subr.mxu0 0.0
        %1526 = vmatpush1.msra.mxu0 0.0
        %1527 = vmatprep.subr.mxu0 0.0
        %1528 = vmatpush1.msra.mxu0 0.0
        %1529 = vmatprep.subr.mxu0 0.0
        %1530 = vmatpush1.msra.mxu0 0.0
        %1531 = vmatprep.subr.mxu0 0.0
        %1532 = vmatpush1.msra.mxu0 0.0
        %1533 = vmatprep.subr.mxu0 0.0
        %1534 = vmatpush1.msra.mxu0 0.0
        %1535 = vmatprep.subr.mxu0 0.0
        %1536 = vmatpush1.msra.mxu0 0.0
        %1537 = vmatprep.subr.mxu0 0.0
        %1538 = vmatpush1.msra.mxu0 0.0
        %1539 = vmatprep.subr.mxu0 0.0
        %1540 = vmatpush1.msra.mxu0 0.0
        %1541 = vmatprep.subr.mxu0 0.0
        %1542 = vmatpush1.msra.mxu0 0.0
        %1543 = vmatprep.subr.mxu0 0.0
        %1544 = vmatpush1.msra.mxu0 0.0
        %1545 = vmatprep.subr.mxu0 0.0
        %1546 = vmatpush1.msra.mxu0 0.0
        %1547 = vmatprep.subr.mxu0 0.0
        %1548 = vmatpush1.msra.mxu0 0.0
        %1549 = vmatprep.subr.mxu0 0.0
        %1550 = vmatpush1.msra.mxu0 0.0
        %1551 = vmatprep.subr.mxu0 0.0
        %1552 = vmatpush1.msra.mxu0 0.0
        %1553 = vmatprep.subr.mxu0 0.0
        %1554 = vmatpush1.msra.mxu0 0.0
        %1555 = vmatprep.subr.mxu0 0.0
        %1556 = vmatpush1.msra.mxu0 0.0
        %1557 = vmatprep.subr.mxu0 0.0
        %1558 = vmatpush1.msra.mxu0 0.0
        %1559 = vmatprep.subr.mxu0 0.0
        %1560 = vmatpush1.msra.mxu0 0.0
        %1561 = vmatprep.subr.mxu0 0.0
        %1562 = vmatpush1.msra.mxu0 0.0
        %1563 = vmatprep.subr.mxu0 0.0
        %1564 = vmatpush1.msra.mxu0 0.0
        %1565 = vmatprep.subr.mxu0 0.0
        %1566 = vmatpush1.msra.mxu0 0.0
        %1567 = vmatprep.subr.mxu0 0.0
        %1568 = vmatpush1.msra.mxu0 0.0
        %1569 = vmatprep.subr.mxu0 0.0
        %1570 = vmatpush1.msra.mxu0 0.0
        %1571 = vmatprep.subr.mxu0 0.0
        %1572 = vmatpush1.msra.mxu0 0.0
        %1573 = vmatprep.subr.mxu0 0.0
        %1574 = vmatpush1.msra.mxu0 0.0
        %1575 = vmatprep.subr.mxu0 0.0
        %1576 = vmatpush1.msra.mxu0 0.0
        %1577 = vmatprep.subr.mxu0 0.0
        %1578 = vmatpush1.msra.mxu0 0.0
        %1579 = vmatprep.subr.mxu0 0.0
        %1580 = vmatpush1.msra.mxu0 0.0
        %1581 = vmatprep.subr.mxu0 0.0
        %1582 = vmatpush1.msra.mxu0 0.0
        %1583 = vmatprep.subr.mxu0 0.0
        %1584 = vmatpush1.msra.mxu0 0.0
        %1585 = vmatprep.mubr.f32.mxu0 0.0
        %1586 = vmatmul.mubr.f32.gmra.mrb[0].mxu0 %v1515
        %v1587 = vpop.f32.mrb[0].mxu0
        %v1588 = vadd.f32 0.0, %v1587
        %v1589 = vpop.f32.mrb[0].mxu0
        %v1590 = vadd.f32 0.0, %v1589
        %1591 = vdwg.mxu0
        %v1592 = vadd.f32 %v1505, %v1588
        %v1593 = vadd.f32 %v1506, %v1590
        %s1594 = scalar_lea.vmem %s4, 20
        %v1595 = vld [vmem:[%s1594] sm:$0xf]
        %1596 = vrot.lane.b32.xlu0 %v1165, 106
        %v1597 = vpop.permute.xlu0 %1596
        %1598 = vrot.lane.b32.xlu0 %v1166, 106
        %v1599 = vpop.permute.xlu0 %1598
        %v1600 = vsel %vm790, %v1597, %v1599
        %v1602 = vsel %vm362, %v1595, 0
        %v1604 = vsel %vm366, %v1600, 0
        %v1606 = vsel %vm366, %v1599, 0
        %1608 = vmatprep.subr.mxu0 %v1606
        %1609 = vmatpush1.msra.mxu0 %v1604
        %1610 = vmatprep.subr.mxu0 0.0
        %1611 = vmatpush1.msra.mxu0 0.0
        %1612 = vmatprep.subr.mxu0 0.0
        %1613 = vmatpush1.msra.mxu0 0.0
        %1614 = vmatprep.subr.mxu0 0.0
        %1615 = vmatpush1.msra.mxu0 0.0
        %1616 = vmatprep.subr.mxu0 0.0
        %1617 = vmatpush1.msra.mxu0 0.0
        %1618 = vmatprep.subr.mxu0 0.0
        %1619 = vmatpush1.msra.mxu0 0.0
        %1620 = vmatprep.subr.mxu0 0.0
        %1621 = vmatpush1.msra.mxu0 0.0
        %1622 = vmatprep.subr.mxu0 0.0
        %1623 = vmatpush1.msra.mxu0 0.0
        %1624 = vmatprep.subr.mxu0 0.0
        %1625 = vmatpush1.msra.mxu0 0.0
        %1626 = vmatprep.subr.mxu0 0.0
        %1627 = vmatpush1.msra.mxu0 0.0
        %1628 = vmatprep.subr.mxu0 0.0
        %1629 = vmatpush1.msra.mxu0 0.0
        %1630 = vmatprep.subr.mxu0 0.0
        %1631 = vmatpush1.msra.mxu0 0.0
        %1632 = vmatprep.subr.mxu0 0.0
        %1633 = vmatpush1.msra.mxu0 0.0
        %1634 = vmatprep.subr.mxu0 0.0
        %1635 = vmatpush1.msra.mxu0 0.0
        %1636 = vmatprep.subr.mxu0 0.0
        %1637 = vmatpush1.msra.mxu0 0.0
        %1638 = vmatprep.subr.mxu0 0.0
        %1639 = vmatpush1.msra.mxu0 0.0
        %1640 = vmatprep.subr.mxu0 0.0
        %1641 = vmatpush1.msra.mxu0 0.0
        %1642 = vmatprep.subr.mxu0 0.0
        %1643 = vmatpush1.msra.mxu0 0.0
        %1644 = vmatprep.subr.mxu0 0.0
        %1645 = vmatpush1.msra.mxu0 0.0
        %1646 = vmatprep.subr.mxu0 0.0
        %1647 = vmatpush1.msra.mxu0 0.0
        %1648 = vmatprep.subr.mxu0 0.0
        %1649 = vmatpush1.msra.mxu0 0.0
        %1650 = vmatprep.subr.mxu0 0.0
        %1651 = vmatpush1.msra.mxu0 0.0
        %1652 = vmatprep.subr.mxu0 0.0
        %1653 = vmatpush1.msra.mxu0 0.0
        %1654 = vmatprep.subr.mxu0 0.0
        %1655 = vmatpush1.msra.mxu0 0.0
        %1656 = vmatprep.subr.mxu0 0.0
        %1657 = vmatpush1.msra.mxu0 0.0
        %1658 = vmatprep.subr.mxu0 0.0
        %1659 = vmatpush1.msra.mxu0 0.0
        %1660 = vmatprep.subr.mxu0 0.0
        %1661 = vmatpush1.msra.mxu0 0.0
        %1662 = vmatprep.subr.mxu0 0.0
        %1663 = vmatpush1.msra.mxu0 0.0
        %1664 = vmatprep.subr.mxu0 0.0
        %1665 = vmatpush1.msra.mxu0 0.0
        %1666 = vmatprep.subr.mxu0 0.0
        %1667 = vmatpush1.msra.mxu0 0.0
        %1668 = vmatprep.subr.mxu0 0.0
        %1669 = vmatpush1.msra.mxu0 0.0
        %1670 = vmatprep.subr.mxu0 0.0
        %1671 = vmatpush1.msra.mxu0 0.0
        %1672 = vmatprep.mubr.f32.mxu0 0.0
        %1673 = vmatmul.mubr.f32.gmra.mrb[0].mxu0 %v1602
        %v1674 = vpop.f32.mrb[0].mxu0
        %v1675 = vadd.f32 0.0, %v1674
        %v1676 = vpop.f32.mrb[0].mxu0
        %v1677 = vadd.f32 0.0, %v1676
        %1678 = vdwg.mxu0
        %v1679 = vadd.f32 %v1592, %v1675
        %v1680 = vadd.f32 %v1593, %v1677
        %s1681 = scalar_lea.vmem %s4, 24
        %v1682 = vld [vmem:[%s1681] sm:$0xf]
        %1683 = vrot.lane.b32.xlu0 %v1165, 88
        %v1684 = vpop.permute.xlu0 %1683
        %1685 = vrot.lane.b32.xlu0 %v1166, 88
        %v1686 = vpop.permute.xlu0 %1685
        %v1687 = vsel %vm878, %v1684, %v1686
        %v1689 = vsel %vm362, %v1682, 0
        %v1691 = vsel %vm366, %v1687, 0
        %v1693 = vsel %vm366, %v1686, 0
        %1695 = vmatprep.subr.mxu0 %v1693
        %1696 = vmatpush1.msra.mxu0 %v1691
        %1697 = vmatprep.subr.mxu0 0.0
        %1698 = vmatpush1.msra.mxu0 0.0
        %1699 = vmatprep.subr.mxu0 0.0
        %1700 = vmatpush1.msra.mxu0 0.0
        %1701 = vmatprep.subr.mxu0 0.0
        %1702 = vmatpush1.msra.mxu0 0.0
        %1703 = vmatprep.subr.mxu0 0.0
        %1704 = vmatpush1.msra.mxu0 0.0
        %1705 = vmatprep.subr.mxu0 0.0
        %1706 = vmatpush1.msra.mxu0 0.0
        %1707 = vmatprep.subr.mxu0 0.0
        %1708 = vmatpush1.msra.mxu0 0.0
        %1709 = vmatprep.subr.mxu0 0.0
        %1710 = vmatpush1.msra.mxu0 0.0
        %1711 = vmatprep.subr.mxu0 0.0
        %1712 = vmatpush1.msra.mxu0 0.0
        %1713 = vmatprep.subr.mxu0 0.0
        %1714 = vmatpush1.msra.mxu0 0.0
        %1715 = vmatprep.subr.mxu0 0.0
        %1716 = vmatpush1.msra.mxu0 0.0
        %1717 = vmatprep.subr.mxu0 0.0
        %1718 = vmatpush1.msra.mxu0 0.0
        %1719 = vmatprep.subr.mxu0 0.0
        %1720 = vmatpush1.msra.mxu0 0.0
        %1721 = vmatprep.subr.mxu0 0.0
        %1722 = vmatpush1.msra.mxu0 0.0
        %1723 = vmatprep.subr.mxu0 0.0
        %1724 = vmatpush1.msra.mxu0 0.0
        %1725 = vmatprep.subr.mxu0 0.0
        %1726 = vmatpush1.msra.mxu0 0.0
        %1727 = vmatprep.subr.mxu0 0.0
        %1728 = vmatpush1.msra.mxu0 0.0
        %1729 = vmatprep.subr.mxu0 0.0
        %1730 = vmatpush1.msra.mxu0 0.0
        %1731 = vmatprep.subr.mxu0 0.0
        %1732 = vmatpush1.msra.mxu0 0.0
        %1733 = vmatprep.subr.mxu0 0.0
        %1734 = vmatpush1.msra.mxu0 0.0
        %1735 = vmatprep.subr.mxu0 0.0
        %1736 = vmatpush1.msra.mxu0 0.0
        %1737 = vmatprep.subr.mxu0 0.0
        %1738 = vmatpush1.msra.mxu0 0.0
        %1739 = vmatprep.subr.mxu0 0.0
        %1740 = vmatpush1.msra.mxu0 0.0
        %1741 = vmatprep.subr.mxu0 0.0
        %1742 = vmatpush1.msra.mxu0 0.0
        %1743 = vmatprep.subr.mxu0 0.0
        %1744 = vmatpush1.msra.mxu0 0.0
        %1745 = vmatprep.subr.mxu0 0.0
        %1746 = vmatpush1.msra.mxu0 0.0
        %1747 = vmatprep.subr.mxu0 0.0
        %1748 = vmatpush1.msra.mxu0 0.0
        %1749 = vmatprep.subr.mxu0 0.0
        %1750 = vmatpush1.msra.mxu0 0.0
        %1751 = vmatprep.subr.mxu0 0.0
        %1752 = vmatpush1.msra.mxu0 0.0
        %1753 = vmatprep.subr.mxu0 0.0
        %1754 = vmatpush1.msra.mxu0 0.0
        %1755 = vmatprep.subr.mxu0 0.0
        %1756 = vmatpush1.msra.mxu0 0.0
        %1757 = vmatprep.subr.mxu0 0.0
        %1758 = vmatpush1.msra.mxu0 0.0
        %1759 = vmatprep.mubr.f32.mxu0 0.0
        %1760 = vmatmul.mubr.f32.gmra.mrb[0].mxu0 %v1689
        %v1761 = vpop.f32.mrb[0].mxu0
        %v1762 = vadd.f32 0.0, %v1761
        %v1763 = vpop.f32.mrb[0].mxu0
        %v1764 = vadd.f32 0.0, %v1763
        %1765 = vdwg.mxu0
        %v1766 = vadd.f32 %v1679, %v1762
        %v1767 = vadd.f32 %v1680, %v1764
        %s1768 = scalar_lea.vmem %s4, 28
        %v1769 = vld [vmem:[%s1768] sm:$0xf]
        %1770 = vrot.lane.b32.xlu0 %v1165, 87
        %v1771 = vpop.permute.xlu0 %1770
        %1772 = vrot.lane.b32.xlu0 %v1166, 87
        %v1773 = vpop.permute.xlu0 %1772
        %v1774 = vsel %vm966, %v1771, %v1773
        %v1776 = vsel %vm362, %v1769, 0
        %v1778 = vsel %vm366, %v1774, 0
        %v1780 = vsel %vm366, %v1773, 0
        %1782 = vmatprep.subr.mxu0 %v1780
        %1783 = vmatpush1.msra.mxu0 %v1778
        %1784 = vmatprep.subr.mxu0 0.0
        %1785 = vmatpush1.msra.mxu0 0.0
        %1786 = vmatprep.subr.mxu0 0.0
        %1787 = vmatpush1.msra.mxu0 0.0
        %1788 = vmatprep.subr.mxu0 0.0
        %1789 = vmatpush1.msra.mxu0 0.0
        %1790 = vmatprep.subr.mxu0 0.0
        %1791 = vmatpush1.msra.mxu0 0.0
        %1792 = vmatprep.subr.mxu0 0.0
        %1793 = vmatpush1.msra.mxu0 0.0
        %1794 = vmatprep.subr.mxu0 0.0
        %1795 = vmatpush1.msra.mxu0 0.0
        %1796 = vmatprep.subr.mxu0 0.0
        %1797 = vmatpush1.msra.mxu0 0.0
        %1798 = vmatprep.subr.mxu0 0.0
        %1799 = vmatpush1.msra.mxu0 0.0
        %1800 = vmatprep.subr.mxu0 0.0
        %1801 = vmatpush1.msra.mxu0 0.0
        %1802 = vmatprep.subr.mxu0 0.0
        %1803 = vmatpush1.msra.mxu0 0.0
        %1804 = vmatprep.subr.mxu0 0.0
        %1805 = vmatpush1.msra.mxu0 0.0
        %1806 = vmatprep.subr.mxu0 0.0
        %1807 = vmatpush1.msra.mxu0 0.0
        %1808 = vmatprep.subr.mxu0 0.0
        %1809 = vmatpush1.msra.mxu0 0.0
        %1810 = vmatprep.subr.mxu0 0.0
        %1811 = vmatpush1.msra.mxu0 0.0
        %1812 = vmatprep.subr.mxu0 0.0
        %1813 = vmatpush1.msra.mxu0 0.0
        %1814 = vmatprep.subr.mxu0 0.0
        %1815 = vmatpush1.msra.mxu0 0.0
        %1816 = vmatprep.subr.mxu0 0.0
        %1817 = vmatpush1.msra.mxu0 0.0
        %1818 = vmatprep.subr.mxu0 0.0
        %1819 = vmatpush1.msra.mxu0 0.0
        %1820 = vmatprep.subr.mxu0 0.0
        %1821 = vmatpush1.msra.mxu0 0.0
        %1822 = vmatprep.subr.mxu0 0.0
        %1823 = vmatpush1.msra.mxu0 0.0
        %1824 = vmatprep.subr.mxu0 0.0
        %1825 = vmatpush1.msra.mxu0 0.0
        %1826 = vmatprep.subr.mxu0 0.0
        %1827 = vmatpush1.msra.mxu0 0.0
        %1828 = vmatprep.subr.mxu0 0.0
        %1829 = vmatpush1.msra.mxu0 0.0
        %1830 = vmatprep.subr.mxu0 0.0
        %1831 = vmatpush1.msra.mxu0 0.0
        %1832 = vmatprep.subr.mxu0 0.0
        %1833 = vmatpush1.msra.mxu0 0.0
        %1834 = vmatprep.subr.mxu0 0.0
        %1835 = vmatpush1.msra.mxu0 0.0
        %1836 = vmatprep.subr.mxu0 0.0
        %1837 = vmatpush1.msra.mxu0 0.0
        %1838 = vmatprep.subr.mxu0 0.0
        %1839 = vmatpush1.msra.mxu0 0.0
        %1840 = vmatprep.subr.mxu0 0.0
        %1841 = vmatpush1.msra.mxu0 0.0
        %1842 = vmatprep.subr.mxu0 0.0
        %1843 = vmatpush1.msra.mxu0 0.0
        %1844 = vmatprep.subr.mxu0 0.0
        %1845 = vmatpush1.msra.mxu0 0.0
        %1846 = vmatprep.mubr.f32.mxu0 0.0
        %1847 = vmatmul.mubr.f32.gmra.mrb[0].mxu0 %v1776
        %v1848 = vpop.f32.mrb[0].mxu0
        %v1849 = vadd.f32 0.0, %v1848
        %v1850 = vpop.f32.mrb[0].mxu0
        %v1851 = vadd.f32 0.0, %v1850
        %1852 = vdwg.mxu0
        %v1853 = vadd.f32 %v1766, %v1849
        %v1854 = vadd.f32 %v1767, %v1851
        %s1855 = scalar_lea.vmem %s4, 32
        %v1856 = vld [vmem:[%s1855] sm:$0xf]
        %1857 = vrot.lane.b32.xlu0 %v1165, 86
        %v1858 = vpop.permute.xlu0 %1857
        %1859 = vrot.lane.b32.xlu0 %v1166, 86
        %v1860 = vpop.permute.xlu0 %1859
        %v1861 = vsel %vm1054, %v1858, %v1860
        %v1863 = vsel %vm362, %v1856, 0
        %v1865 = vsel %vm366, %v1861, 0
        %v1867 = vsel %vm366, %v1860, 0
        %1869 = vmatprep.subr.mxu0 %v1867
        %1870 = vmatpush1.msra.mxu0 %v1865
        %1871 = vmatprep.subr.mxu0 0.0
        %1872 = vmatpush1.msra.mxu0 0.0
        %1873 = vmatprep.subr.mxu0 0.0
        %1874 = vmatpush1.msra.mxu0 0.0
        %1875 = vmatprep.subr.mxu0 0.0
        %1876 = vmatpush1.msra.mxu0 0.0
        %1877 = vmatprep.subr.mxu0 0.0
        %1878 = vmatpush1.msra.mxu0 0.0
        %1879 = vmatprep.subr.mxu0 0.0
        %1880 = vmatpush1.msra.mxu0 0.0
        %1881 = vmatprep.subr.mxu0 0.0
        %1882 = vmatpush1.msra.mxu0 0.0
        %1883 = vmatprep.subr.mxu0 0.0
        %1884 = vmatpush1.msra.mxu0 0.0
        %1885 = vmatprep.subr.mxu0 0.0
        %1886 = vmatpush1.msra.mxu0 0.0
        %1887 = vmatprep.subr.mxu0 0.0
        %1888 = vmatpush1.msra.mxu0 0.0
        %1889 = vmatprep.subr.mxu0 0.0
        %1890 = vmatpush1.msra.mxu0 0.0
        %1891 = vmatprep.subr.mxu0 0.0
        %1892 = vmatpush1.msra.mxu0 0.0
        %1893 = vmatprep.subr.mxu0 0.0
        %1894 = vmatpush1.msra.mxu0 0.0
        %1895 = vmatprep.subr.mxu0 0.0
        %1896 = vmatpush1.msra.mxu0 0.0
        %1897 = vmatprep.subr.mxu0 0.0
        %1898 = vmatpush1.msra.mxu0 0.0
        %1899 = vmatprep.subr.mxu0 0.0
        %1900 = vmatpush1.msra.mxu0 0.0
        %1901 = vmatprep.subr.mxu0 0.0
        %1902 = vmatpush1.msra.mxu0 0.0
        %1903 = vmatprep.subr.mxu0 0.0
        %1904 = vmatpush1.msra.mxu0 0.0
        %1905 = vmatprep.subr.mxu0 0.0
        %1906 = vmatpush1.msra.mxu0 0.0
        %1907 = vmatprep.subr.mxu0 0.0
        %1908 = vmatpush1.msra.mxu0 0.0
        %1909 = vmatprep.subr.mxu0 0.0
        %1910 = vmatpush1.msra.mxu0 0.0
        %1911 = vmatprep.subr.mxu0 0.0
        %1912 = vmatpush1.msra.mxu0 0.0
        %1913 = vmatprep.subr.mxu0 0.0
        %1914 = vmatpush1.msra.mxu0 0.0
        %1915 = vmatprep.subr.mxu0 0.0
        %1916 = vmatpush1.msra.mxu0 0.0
        %1917 = vmatprep.subr.mxu0 0.0
        %1918 = vmatpush1.msra.mxu0 0.0
        %1919 = vmatprep.subr.mxu0 0.0
        %1920 = vmatpush1.msra.mxu0 0.0
        %1921 = vmatprep.subr.mxu0 0.0
        %1922 = vmatpush1.msra.mxu0 0.0
        %1923 = vmatprep.subr.mxu0 0.0
        %1924 = vmatpush1.msra.mxu0 0.0
        %1925 = vmatprep.subr.mxu0 0.0
        %1926 = vmatpush1.msra.mxu0 0.0
        %1927 = vmatprep.subr.mxu0 0.0
        %1928 = vmatpush1.msra.mxu0 0.0
        %1929 = vmatprep.subr.mxu0 0.0
        %1930 = vmatpush1.msra.mxu0 0.0
        %1931 = vmatprep.subr.mxu0 0.0
        %1932 = vmatpush1.msra.mxu0 0.0
        %1933 = vmatprep.mubr.f32.mxu0 0.0
        %1934 = vmatmul.mubr.f32.gmra.mrb[0].mxu0 %v1863
        %v1935 = vpop.f32.mrb[0].mxu0
        %v1936 = vadd.f32 0.0, %v1935
        %v1937 = vpop.f32.mrb[0].mxu0
        %v1938 = vadd.f32 0.0, %v1937
        %1939 = vdwg.mxu0
        %v1940 = vadd.f32 %v1853, %v1936
        %v1941 = vadd.f32 %v1854, %v1938
        %v1942 = vld [vmem:[%s5] sm:$0xf]
        %1944 = vset.pattern.permute.xlu0 0
        %1945 = vperm.xlu0 %1944, %v1942
        %v1946 = vpop.permute.xlu0 %1945
        %v1948 = vmul.f32 %v1940, %v1946
        %v1949 = vmul.f32 %v1941, %v1946
        %v1950 = vld [vmem:[%s6] sm:$0xf]
        %1952 = vset.pattern.permute.xlu0 0
        %1953 = vperm.xlu0 %1952, %v1950
        %v1954 = vpop.permute.xlu0 %1953
        %v1956 = vadd.f32 %v1948, %v1954
        %v1957 = vadd.f32 %v1949, %v1954
        %v1960 = vadd.f32 %v1956, %v1055
        %v1961 = vadd.f32 %v1957, %v1053
        %v1962 = vmax.f32 %v1960, 0.0
        %v1963 = vmax.f32 %v1961, 0.0
        %v1966 = vcombine.low %v1962, %v1963
        %vm1968 = vcmask 228356
        %vm1969 = vmor %vm1968, %vm366
        %1970 = vst.msk [vmem:[%s335] sm:$0xff] %vm1969, %v1966
        %s1971 = sand.u32 %s224, 1
        %s1972 = scalar_lea.sflag [#allocation3], %s1971
        %s1973 = sand.u32 %s224, 1
        %s1974 = smul.addr %s1973, 8
        %s1975 = scalar_lea.vmem [#allocation2], %s1974
        // Predicated region
        $region53: #{tpu_custom_call.1} parent=51 // pred_check
          %p1976 = pneg %p234
        $region54: #{tpu_custom_call.1} parent=51 // pred_check_branch
          %1978 = sbr.rel (%p1976) target = $region56
        $region55: #{tpu_custom_call.1} parent=51 // pred_region
          %s1980 = ssub.s32 128, 128
          %1981 = vsyncadd %s1972, %s1980
          %s1982 = smul.addr %s27, 2
          %s1983 = smul.addr %s26, 4
          %s1984 = sadd.s32 %s1982, %s1983
          %s1985 = smul.addr %s1984, 64
          %s1986 = scalar_lea.hbm %s8, %s1985
          %s1988 = sshll.u32 %s1975, 4
          %s1989 = int_to_ptr.vmem [resolvable:$true] %s1988
          %1991 = dma.vmem_to_hbm [thread:$0]  %s1989, 128, %s1986, %s1972
        $region56: #{tpu_custom_call.1} parent=51 // pred_fallthru
          _
      $region52: #{tpu_custom_call.1} parent=5 // pred_fallthru
        _
      %p1992 = scmp.le.s32.totalorder 2, %s17
      // Predicated region
      $region57: #{tpu_custom_call.1} parent=5 // pred_check
        %p1993 = pneg %p1992
      $region58: #{tpu_custom_call.1} parent=5 // pred_check_branch
        %1995 = sbr.rel (%p1993) target = $region60
      $region59: #{tpu_custom_call.1} parent=5 // pred_region
        %s1996 = ssub.s32 %s17, 2
        // Predicated region
        $region61: #{tpu_custom_call.1} parent=59 // pred_check
          %p1997 = pneg %p240
        $region62: #{tpu_custom_call.1} parent=59 // pred_check_branch
          %1999 = sbr.rel (%p1997) target = $region64
        $region63: #{tpu_custom_call.1} parent=59 // pred_region
          %s2000 = sand.u32 %s225, 1
          %s2001 = scalar_lea.sflag [#allocation3], %s2000
          %s2002 = sand.u32 %s225, 1
          %s2003 = smul.addr %s2002, 8
          %s2004 = scalar_lea.vmem [#allocation2], %s2003
          %2005 = dma.done %s2001, 128
        $region64: #{tpu_custom_call.1} parent=59 // pred_fallthru
          _
      $region60: #{tpu_custom_call.1} parent=5 // pred_fallthru
        _
    $region6: #{tpu_custom_call.1} parent=1 // loop_footer
      %s21 = sadd.s32 1, %s17
    $region7: #{tpu_custom_call.1} parent=1 // loop_footer_branch
      %16 = sbr.rel target = $region3
    $region8: #{tpu_custom_call.1} parent=1 // loop_exit
      _
    %2006 = vsyncpa [#allocation3], 1
    %s2007 = scalar_lea.sflag [#allocation3], 1
    %2008 = vsyncpa %s2007, 1

</llo_original>
